<compile_context>
chip_gen: v5e
topology: v5e:2x2
jax: 0.10.0
libtpu: 0.0.40
codegen_flags: <defaults>
</compile_context>

<pallas_src>
import functools

import jax
import jax.numpy as jnp
from jax.experimental import pallas as pl
from jax.experimental.pallas import tpu as pltpu

NUM_HEAD = 4
HIDDEN = 32
FFN_HIDDEN = 64
NUM_BLOCKS = 2
LN_EPS = 1e-5          # PyTorch LayerNorm default
NEG_INF = -1e30        # additive key-padding bias for masked keys

PARAM_ORDER = ("wq", "bq", "wk", "bk", "wv", "bv", "wo", "bo",
               "ln1w", "ln1b", "w1", "b1", "w2", "b2", "ln2w", "ln2b")


def _layer_norm(x, w, b):
    mu = jnp.mean(x, axis=-1, keepdims=True)
    var = jnp.mean((x - mu) ** 2, axis=-1, keepdims=True)
    return (x - mu) * jax.lax.rsqrt(var + LN_EPS) * w + b


# ----------------------------------------------------------------------------- kernel
def bert_encoder_kernel(x_ref, bias_ref,
                        wq_ref, bq_ref, wk_ref, bk_ref, wv_ref, bv_ref,
                        wo_ref, bo_ref, ln1w_ref, ln1b_ref,
                        w1_ref, b1_ref, w2_ref, b2_ref,
                        ln2w_ref, ln2b_ref,
                        o_ref, *, num_head, num_layers):
    """Full encoder stack (num_layers post-norm layers) in one kernel invocation."""
    B, S, H = x_ref.shape
    hd = H // num_head
    M = B * S

    # Running activation, flattened so every projection/FFN matmul is one (M,H) slab.
    h = x_ref[...].reshape(M, H)
    # Hoisted once: additive key-padding bias broadcast to full (B, S_q, S_k).
    kbias = jnp.broadcast_to(bias_ref[...], (B, S, S))

    for l in range(num_layers):                      # static loop over fused layers
        wq, bq = wq_ref[l], bq_ref[l]                # 1/sqrt(hd) already folded in
        wk, bk = wk_ref[l], bk_ref[l]
        wv, bv = wv_ref[l], bv_ref[l]
        wo_t, bo = wo_ref[l], bo_ref[l]
        ln1w, ln1b = ln1w_ref[l], ln1b_ref[l]
        w1_t, b1 = w1_ref[l], b1_ref[l]
        w2_t, b2 = w2_ref[l], b2_ref[l]
        ln2w, ln2b = ln2w_ref[l], ln2b_ref[l]

        # --- QKV projections on the flattened (B*S, H) slab -------------------
        q = jnp.dot(h, wq, preferred_element_type=jnp.float32) + bq
        k = jnp.dot(h, wk, preferred_element_type=jnp.float32) + bk
        v = jnp.dot(h, wv, preferred_element_type=jnp.float32) + bv
        q3 = q.reshape(B, S, H)
        k3 = k.reshape(B, S, H)
        v3 = v.reshape(B, S, H)

        # --- multi-head self attention ----------------------------------------
        # Heads are a short static loop; the batch dim is handled by batched
        # einsums. The output projection is decomposed per head over sublane-
        # aligned rows of Wo^T, so no lane concat of head outputs is needed.
        attn = jnp.zeros((M, H), jnp.float32)
        for n in range(num_head):
            lo = n * hd
            qh = q3[:, :, lo:lo + hd]
            kh = k3[:, :, lo:lo + hd]
            vh = v3[:, :, lo:lo + hd]
            s = jnp.einsum("bqd,bkd->bqk", qh, kh,
                           preferred_element_type=jnp.float32)
            s = s + kbias                          # broadcast over query rows
            s = s - jnp.max(s, axis=-1, keepdims=True)
            e = jnp.exp(s)
            p = e * pl.reciprocal(jnp.sum(e, axis=-1, keepdims=True), approx=True)
            ctx = jnp.einsum("bqk,bkd->bqd", p, vh,
                             preferred_element_type=jnp.float32)
            attn = attn + jnp.dot(ctx.reshape(M, hd), wo_t[lo:lo + hd, :],
                                  preferred_element_type=jnp.float32)
        attn = attn + bo

        # --- residual + norm1 (dropout is identity in eval mode) --------------
        y = _layer_norm(h + attn, ln1w, ln1b)

        # --- feed-forward -------------------------------------------------------
        ff = jnp.maximum(jnp.dot(y, w1_t, preferred_element_type=jnp.float32) + b1, 0.0)
        ff = jnp.dot(ff, w2_t, preferred_element_type=jnp.float32) + b2

        # --- residual + norm2 ---------------------------------------------------
        h = _layer_norm(y + ff, ln2w, ln2b)

    o_ref[...] = h.reshape(B, S, H)


# ----------------------------------------------------------------------------- param prep
def prepare_params(layer_params, num_head):
    """One-time packing OUTSIDE jit: split fused QKV, transpose weights to [in,out],
    fold the 1/sqrt(head_dim) score scale into Wq/bq, stack across layers."""
    H = layer_params[0]["wo"].shape[0]
    hd = H // num_head
    scale = 1.0 / float(hd) ** 0.5
    stk = lambda fn: jnp.stack([jnp.asarray(fn(p), jnp.float32) for p in layer_params])
    return dict(
        wq=stk(lambda p: p["wqkv"][0 * H:1 * H].T * scale),   # (L, H, H)
        bq=stk(lambda p: p["bqkv"][0 * H:1 * H].reshape(1, H) * scale),
        wk=stk(lambda p: p["wqkv"][1 * H:2 * H].T),
        bk=stk(lambda p: p["bqkv"][1 * H:2 * H].reshape(1, H)),
        wv=stk(lambda p: p["wqkv"][2 * H:3 * H].T),
        bv=stk(lambda p: p["bqkv"][2 * H:3 * H].reshape(1, H)),
        wo=stk(lambda p: p["wo"].T),                          # (L, H, H)
        bo=stk(lambda p: p["bo"].reshape(1, H)),
        ln1w=stk(lambda p: p["ln1_w"].reshape(1, H)),
        ln1b=stk(lambda p: p["ln1_b"].reshape(1, H)),
        w1=stk(lambda p: p["w1"].T),                          # (L, H, F)
        b1=stk(lambda p: p["b1"].reshape(1, -1)),
        w2=stk(lambda p: p["w2"].T),                          # (L, F, H)
        b2=stk(lambda p: p["b2"].reshape(1, H)),
        ln2w=stk(lambda p: p["ln2_w"].reshape(1, H)),
        ln2b=stk(lambda p: p["ln2_b"].reshape(1, H)),
    )


# ----------------------------------------------------------------------------- wrapper
@functools.partial(jax.jit, static_argnames=("num_head",))
def bert_encoder_v2(x, key_padding_mask, packed, num_head):
    """Equivalent of BERTEncoderV2.forward((input, mask)) in eval mode: ONE pallas_call."""
    B, S, H = x.shape
    num_layers = packed["wq"].shape[0]
    # True in key_padding_mask == padded position (not attended to).
    # TODO(synk): a fully-padded row yields uniform attention here, while PyTorch returns NaN.
    mask_bias = jnp.where(key_padding_mask, NEG_INF, 0.0).astype(jnp.float32)[:, None, :]
    inputs = (x, mask_bias) + tuple(packed[k] for k in PARAM_ORDER)
    kernel = functools.partial(bert_encoder_kernel,
                               num_head=num_head, num_layers=num_layers)
    return pl.pallas_call(
        kernel,
        out_shape=jax.ShapeDtypeStruct((B, S, H), jnp.float32),
        in_specs=[pl.BlockSpec(memory_space=pltpu.MemorySpace.VMEM)] * len(inputs),
        out_specs=pl.BlockSpec(memory_space=pltpu.MemorySpace.VMEM),
        input_output_aliases={0: 0},
    )(*inputs)


# ----------------------------------------------------------------------------- params
def init_params(key, num_layers, hidden, ffn):
    layers = []
    for _ in range(num_layers):
        key, *ks = jax.random.split(key, 9)
        layers.append(dict(
            wqkv=0.1 * jax.random.normal(ks[0], (3 * hidden, hidden), jnp.float32),
            bqkv=0.02 * jax.random.normal(ks[1], (3 * hidden,), jnp.float32),
            wo=0.1 * jax.random.normal(ks[2], (hidden, hidden), jnp.float32),
            bo=0.02 * jax.random.normal(ks[3], (hidden,), jnp.float32),
            w1=0.1 * jax.random.normal(ks[4], (ffn, hidden), jnp.float32),
            b1=0.02 * jax.random.normal(ks[5], (ffn,), jnp.float32),
            w2=0.1 * jax.random.normal(ks[6], (hidden, ffn), jnp.float32),
            b2=0.02 * jax.random.normal(ks[7], (hidden,), jnp.float32),
            ln1_w=jnp.ones((hidden,), jnp.float32),
            ln1_b=jnp.zeros((hidden,), jnp.float32),
            ln2_w=jnp.ones((hidden,), jnp.float32),
            ln2_b=jnp.zeros((hidden,), jnp.float32),
        ))
    return layers


# ----------------------------------------------------------------------------- pure-JAX reference
def _reference_layer(x, mask_bias, p, num_head):
    B, S, H = x.shape
    hd = H // num_head
    hi = jax.lax.Precision.HIGHEST
    qkv = jnp.einsum("bsh,oh->bso", x, p["wqkv"], precision=hi) + p["bqkv"]
    q, k, v = jnp.split(qkv, 3, axis=-1)
    sh = lambda t: t.reshape(B, S, num_head, hd).transpose(0, 2, 1, 3)
    q, k, v = sh(q), sh(k), sh(v)
    s = jnp.einsum("bnqd,bnkd->bnqk", q, k, precision=hi) / jnp.sqrt(float(hd))
    s = s + mask_bias[:, :, None, :]
    a = jax.nn.softmax(s, axis=-1)
    ctx = jnp.einsum("bnqk,bnkd->bnqd", a, v, precision=hi)
    ctx = ctx.transpose(0, 2, 1, 3).reshape(B, S, H)
    out = jnp.einsum("bsh,oh->bso", ctx, p["wo"], precision=hi) + p["bo"]
    y = _layer_norm(x + out, p["ln1_w"], p["ln1_b"])
    ff = jax.nn.relu(jnp.einsum("bsh,fh->bsf", y, p["w1"], precision=hi) + p["b1"])
    ff = jnp.einsum("bsf,hf->bsh", ff, p["w2"], precision=hi) + p["b2"]
    return _layer_norm(y + ff, p["ln2_w"], p["ln2_b"])


def reference(x, key_padding_mask, layer_params, num_head):
    mask_bias = jnp.where(key_padding_mask, NEG_INF, 0.0).astype(jnp.float32)[:, None, :]
    h = x
    for p in layer_params:
        h = _reference_layer(h, mask_bias, p, num_head)
    return h


# ----------------------------------------------------------------------------- main
if __name__ == "__main__":
    B, S = 2, 8
    key = jax.random.PRNGKey(0)
    kx, kp = jax.random.split(key)

    x = jax.random.normal(kx, (B, S, HIDDEN), jnp.float32)
    lengths = jnp.array([S, 5])
    mask = jnp.arange(S)[None, :] >= lengths[:, None]   # True == padding (src_key_padding_mask)
    params = init_params(kp, NUM_BLOCKS, HIDDEN, FFN_HIDDEN)
    packed = prepare_params(params, NUM_HEAD)            # one-time prep, outside jit

    out = bert_encoder_v2(x, mask, packed, NUM_HEAD)
    out = jax.block_until_ready(out)

    ref = reference(x, mask, params, NUM_HEAD)
    assert out.shape == (B, S, HIDDEN)
    assert bool(jnp.all(jnp.isfinite(out)))
    assert bool(jnp.allclose(out, ref, atol=1e-2, rtol=1e-2)), "Pallas kernel mismatch vs reference"

    print("KERNEL_OK")
</pallas_src>

<mosaic_0001>
module attributes {stable_mosaic.version = 11 : i64} {
  func.func @bert_encoder_kernel(%arg0: memref<2x8x32xf32, #tpu.memory_space<vmem>>, %arg1: memref<2x1x8xf32, #tpu.memory_space<vmem>>, %arg2: memref<2x32x32xf32, #tpu.memory_space<vmem>>, %arg3: memref<2x1x32xf32, #tpu.memory_space<vmem>>, %arg4: memref<2x32x32xf32, #tpu.memory_space<vmem>>, %arg5: memref<2x1x32xf32, #tpu.memory_space<vmem>>, %arg6: memref<2x32x32xf32, #tpu.memory_space<vmem>>, %arg7: memref<2x1x32xf32, #tpu.memory_space<vmem>>, %arg8: memref<2x32x32xf32, #tpu.memory_space<vmem>>, %arg9: memref<2x1x32xf32, #tpu.memory_space<vmem>>, %arg10: memref<2x1x32xf32, #tpu.memory_space<vmem>>, %arg11: memref<2x1x32xf32, #tpu.memory_space<vmem>>, %arg12: memref<2x32x64xf32, #tpu.memory_space<vmem>>, %arg13: memref<2x1x64xf32, #tpu.memory_space<vmem>>, %arg14: memref<2x64x32xf32, #tpu.memory_space<vmem>>, %arg15: memref<2x1x32xf32, #tpu.memory_space<vmem>>, %arg16: memref<2x1x32xf32, #tpu.memory_space<vmem>>, %arg17: memref<2x1x32xf32, #tpu.memory_space<vmem>>, %arg18: memref<2x8x32xf32, #tpu.memory_space<vmem>>) attributes {dimension_semantics = [], scalar_prefetch = 0 : i64, scratch_operands = 0 : i64, tpu.core_type = #tpu.core_type<tc>} {
    %c0 = arith.constant 0 : index
    %c0_0 = arith.constant 0 : index
    %c0_1 = arith.constant 0 : index
    %0 = vector.load %arg0[%c0, %c0_0, %c0_1] : memref<2x8x32xf32, #tpu.memory_space<vmem>>, vector<2x8x32xf32>
    %1 = vector.shape_cast %0 : vector<2x8x32xf32> to vector<16x32xf32>
    %c0_2 = arith.constant 0 : index
    %c0_3 = arith.constant 0 : index
    %c0_4 = arith.constant 0 : index
    %2 = vector.load %arg1[%c0_2, %c0_3, %c0_4] : memref<2x1x8xf32, #tpu.memory_space<vmem>>, vector<2x1x8xf32>
    %3 = vector.shape_cast %2 : vector<2x1x8xf32> to vector<2x1x8xf32>
    %4 = vector.broadcast %3 : vector<2x1x8xf32> to vector<2x8x8xf32>
    %c0_5 = arith.constant 0 : index
    %c0_6 = arith.constant 0 : index
    %c0_7 = arith.constant 0 : index
    %5 = vector.load %arg2[%c0_5, %c0_6, %c0_7] : memref<2x32x32xf32, #tpu.memory_space<vmem>>, vector<1x32x32xf32>
    %6 = vector.shape_cast %5 : vector<1x32x32xf32> to vector<32x32xf32>
    %c0_8 = arith.constant 0 : index
    %c0_9 = arith.constant 0 : index
    %c0_10 = arith.constant 0 : index
    %7 = vector.load %arg3[%c0_8, %c0_9, %c0_10] : memref<2x1x32xf32, #tpu.memory_space<vmem>>, vector<1x1x32xf32>
    %8 = vector.shape_cast %7 : vector<1x1x32xf32> to vector<1x32xf32>
    %c0_11 = arith.constant 0 : index
    %c0_12 = arith.constant 0 : index
    %c0_13 = arith.constant 0 : index
    %9 = vector.load %arg4[%c0_11, %c0_12, %c0_13] : memref<2x32x32xf32, #tpu.memory_space<vmem>>, vector<1x32x32xf32>
    %10 = vector.shape_cast %9 : vector<1x32x32xf32> to vector<32x32xf32>
    %c0_14 = arith.constant 0 : index
    %c0_15 = arith.constant 0 : index
    %c0_16 = arith.constant 0 : index
    %11 = vector.load %arg5[%c0_14, %c0_15, %c0_16] : memref<2x1x32xf32, #tpu.memory_space<vmem>>, vector<1x1x32xf32>
    %12 = vector.shape_cast %11 : vector<1x1x32xf32> to vector<1x32xf32>
    %c0_17 = arith.constant 0 : index
    %c0_18 = arith.constant 0 : index
    %c0_19 = arith.constant 0 : index
    %13 = vector.load %arg6[%c0_17, %c0_18, %c0_19] : memref<2x32x32xf32, #tpu.memory_space<vmem>>, vector<1x32x32xf32>
    %14 = vector.shape_cast %13 : vector<1x32x32xf32> to vector<32x32xf32>
    %c0_20 = arith.constant 0 : index
    %c0_21 = arith.constant 0 : index
    %c0_22 = arith.constant 0 : index
    %15 = vector.load %arg7[%c0_20, %c0_21, %c0_22] : memref<2x1x32xf32, #tpu.memory_space<vmem>>, vector<1x1x32xf32>
    %16 = vector.shape_cast %15 : vector<1x1x32xf32> to vector<1x32xf32>
    %c0_23 = arith.constant 0 : index
    %c0_24 = arith.constant 0 : index
    %c0_25 = arith.constant 0 : index
    %17 = vector.load %arg8[%c0_23, %c0_24, %c0_25] : memref<2x32x32xf32, #tpu.memory_space<vmem>>, vector<1x32x32xf32>
    %18 = vector.shape_cast %17 : vector<1x32x32xf32> to vector<32x32xf32>
    %c0_26 = arith.constant 0 : index
    %c0_27 = arith.constant 0 : index
    %c0_28 = arith.constant 0 : index
    %19 = vector.load %arg9[%c0_26, %c0_27, %c0_28] : memref<2x1x32xf32, #tpu.memory_space<vmem>>, vector<1x1x32xf32>
    %20 = vector.shape_cast %19 : vector<1x1x32xf32> to vector<1x32xf32>
    %c0_29 = arith.constant 0 : index
    %c0_30 = arith.constant 0 : index
    %c0_31 = arith.constant 0 : index
    %21 = vector.load %arg10[%c0_29, %c0_30, %c0_31] : memref<2x1x32xf32, #tpu.memory_space<vmem>>, vector<1x1x32xf32>
    %22 = vector.shape_cast %21 : vector<1x1x32xf32> to vector<1x32xf32>
    %c0_32 = arith.constant 0 : index
    %c0_33 = arith.constant 0 : index
    %c0_34 = arith.constant 0 : index
    %23 = vector.load %arg11[%c0_32, %c0_33, %c0_34] : memref<2x1x32xf32, #tpu.memory_space<vmem>>, vector<1x1x32xf32>
    %24 = vector.shape_cast %23 : vector<1x1x32xf32> to vector<1x32xf32>
    %c0_35 = arith.constant 0 : index
    %c0_36 = arith.constant 0 : index
    %c0_37 = arith.constant 0 : index
    %25 = vector.load %arg12[%c0_35, %c0_36, %c0_37] : memref<2x32x64xf32, #tpu.memory_space<vmem>>, vector<1x32x64xf32>
    %26 = vector.shape_cast %25 : vector<1x32x64xf32> to vector<32x64xf32>
    %c0_38 = arith.constant 0 : index
    %c0_39 = arith.constant 0 : index
    %c0_40 = arith.constant 0 : index
    %27 = vector.load %arg13[%c0_38, %c0_39, %c0_40] : memref<2x1x64xf32, #tpu.memory_space<vmem>>, vector<1x1x64xf32>
    %28 = vector.shape_cast %27 : vector<1x1x64xf32> to vector<1x64xf32>
    %c0_41 = arith.constant 0 : index
    %c0_42 = arith.constant 0 : index
    %c0_43 = arith.constant 0 : index
    %29 = vector.load %arg14[%c0_41, %c0_42, %c0_43] : memref<2x64x32xf32, #tpu.memory_space<vmem>>, vector<1x64x32xf32>
    %30 = vector.shape_cast %29 : vector<1x64x32xf32> to vector<64x32xf32>
    %c0_44 = arith.constant 0 : index
    %c0_45 = arith.constant 0 : index
    %c0_46 = arith.constant 0 : index
    %31 = vector.load %arg15[%c0_44, %c0_45, %c0_46] : memref<2x1x32xf32, #tpu.memory_space<vmem>>, vector<1x1x32xf32>
    %32 = vector.shape_cast %31 : vector<1x1x32xf32> to vector<1x32xf32>
    %c0_47 = arith.constant 0 : index
    %c0_48 = arith.constant 0 : index
    %c0_49 = arith.constant 0 : index
    %33 = vector.load %arg16[%c0_47, %c0_48, %c0_49] : memref<2x1x32xf32, #tpu.memory_space<vmem>>, vector<1x1x32xf32>
    %34 = vector.shape_cast %33 : vector<1x1x32xf32> to vector<1x32xf32>
    %c0_50 = arith.constant 0 : index
    %c0_51 = arith.constant 0 : index
    %c0_52 = arith.constant 0 : index
    %35 = vector.load %arg17[%c0_50, %c0_51, %c0_52] : memref<2x1x32xf32, #tpu.memory_space<vmem>>, vector<1x1x32xf32>
    %36 = vector.shape_cast %35 : vector<1x1x32xf32> to vector<1x32xf32>
    %cst = arith.constant dense<0.000000e+00> : vector<16x32xf32>
    %37 = tpu.matmul %1, %6, %cst {dimension_numbers = #tpu.dot_dimension_numbers<[1], [0], [0], [1], [0, 0, 1, 1], [], []>} : vector<16x32xf32>, vector<32x32xf32>, vector<16x32xf32> -> vector<16x32xf32>
    %38 = vector.broadcast %8 : vector<1x32xf32> to vector<16x32xf32>
    %39 = arith.addf %37, %38 : vector<16x32xf32>
    %cst_53 = arith.constant dense<0.000000e+00> : vector<16x32xf32>
    %40 = tpu.matmul %1, %10, %cst_53 {dimension_numbers = #tpu.dot_dimension_numbers<[1], [0], [0], [1], [0, 0, 1, 1], [], []>} : vector<16x32xf32>, vector<32x32xf32>, vector<16x32xf32> -> vector<16x32xf32>
    %41 = vector.broadcast %12 : vector<1x32xf32> to vector<16x32xf32>
    %42 = arith.addf %40, %41 : vector<16x32xf32>
    %cst_54 = arith.constant dense<0.000000e+00> : vector<16x32xf32>
    %43 = tpu.matmul %1, %14, %cst_54 {dimension_numbers = #tpu.dot_dimension_numbers<[1], [0], [0], [1], [0, 0, 1, 1], [], []>} : vector<16x32xf32>, vector<32x32xf32>, vector<16x32xf32> -> vector<16x32xf32>
    %44 = vector.broadcast %16 : vector<1x32xf32> to vector<16x32xf32>
    %45 = arith.addf %43, %44 : vector<16x32xf32>
    %46 = vector.shape_cast %39 : vector<16x32xf32> to vector<2x8x32xf32>
    %47 = vector.shape_cast %42 : vector<16x32xf32> to vector<2x8x32xf32>
    %48 = vector.shape_cast %45 : vector<16x32xf32> to vector<2x8x32xf32>
    %cst_55 = arith.constant 0.000000e+00 : f32
    %49 = vector.broadcast %cst_55 : f32 to vector<16x32xf32>
    %50 = vector.extract_strided_slice %46 {offsets = [0, 0, 0], sizes = [2, 8, 8], strides = [1, 1, 1]} : vector<2x8x32xf32> to vector<2x8x8xf32>
    %51 = vector.extract_strided_slice %47 {offsets = [0, 0, 0], sizes = [2, 8, 8], strides = [1, 1, 1]} : vector<2x8x32xf32> to vector<2x8x8xf32>
    %52 = vector.extract_strided_slice %48 {offsets = [0, 0, 0], sizes = [2, 8, 8], strides = [1, 1, 1]} : vector<2x8x32xf32> to vector<2x8x8xf32>
    "tpu.trace_start"() <{level = 10 : i32, message = "bqd,bkd->bqk"}> : () -> ()
    %cst_56 = arith.constant dense<0.000000e+00> : vector<2x8x8xf32>
    %53 = tpu.matmul %50, %51, %cst_56 {dimension_numbers = #tpu.dot_dimension_numbers<[2], [2], [1], [1], [0, 0, 0, 1, 1, 1], [0], [0]>} : vector<2x8x8xf32>, vector<2x8x8xf32>, vector<2x8x8xf32> -> vector<2x8x8xf32>
    "tpu.trace_stop"() : () -> ()
    %54 = arith.addf %53, %4 : vector<2x8x8xf32>
    %cst_57 = arith.constant dense<0xFF800000> : vector<2x8xf32>
    %55 = vector.multi_reduction <maximumf>, %54, %cst_57 [2] : vector<2x8x8xf32> to vector<2x8xf32>
    %56 = vector.shape_cast %55 : vector<2x8xf32> to vector<2x8x1xf32>
    %57 = vector.broadcast %56 : vector<2x8x1xf32> to vector<2x8x8xf32>
    %58 = arith.subf %54, %57 : vector<2x8x8xf32>
    %59 = math.exp %58 : vector<2x8x8xf32>
    %cst_58 = arith.constant dense<0.000000e+00> : vector<2x8xf32>
    %60 = vector.multi_reduction <add>, %59, %cst_58 [2] : vector<2x8x8xf32> to vector<2x8xf32>
    %61 = vector.shape_cast %60 : vector<2x8xf32> to vector<2x8x1xf32>
    %62 = tpu.reciprocal %61 {approx = true} : vector<2x8x1xf32> -> vector<2x8x1xf32>
    %63 = vector.broadcast %62 : vector<2x8x1xf32> to vector<2x8x8xf32>
    %64 = arith.mulf %59, %63 : vector<2x8x8xf32>
    "tpu.trace_start"() <{level = 10 : i32, message = "bqk,bkd->bqd"}> : () -> ()
    %cst_59 = arith.constant dense<0.000000e+00> : vector<2x8x8xf32>
    %65 = tpu.matmul %64, %52, %cst_59 {dimension_numbers = #tpu.dot_dimension_numbers<[2], [1], [1], [2], [0, 0, 0, 1, 1, 2], [0], [0]>} : vector<2x8x8xf32>, vector<2x8x8xf32>, vector<2x8x8xf32> -> vector<2x8x8xf32>
    "tpu.trace_stop"() : () -> ()
    %66 = vector.shape_cast %65 : vector<2x8x8xf32> to vector<16x8xf32>
    %67 = vector.extract_strided_slice %18 {offsets = [0, 0], sizes = [8, 32], strides = [1, 1]} : vector<32x32xf32> to vector<8x32xf32>
    %cst_60 = arith.constant dense<0.000000e+00> : vector<16x32xf32>
    %68 = tpu.matmul %66, %67, %cst_60 {dimension_numbers = #tpu.dot_dimension_numbers<[1], [0], [0], [1], [0, 0, 1, 1], [], []>} : vector<16x8xf32>, vector<8x32xf32>, vector<16x32xf32> -> vector<16x32xf32>
    %69 = arith.addf %49, %68 : vector<16x32xf32>
    %70 = vector.extract_strided_slice %46 {offsets = [0, 0, 8], sizes = [2, 8, 8], strides = [1, 1, 1]} : vector<2x8x32xf32> to vector<2x8x8xf32>
    %71 = vector.extract_strided_slice %47 {offsets = [0, 0, 8], sizes = [2, 8, 8], strides = [1, 1, 1]} : vector<2x8x32xf32> to vector<2x8x8xf32>
    %72 = vector.extract_strided_slice %48 {offsets = [0, 0, 8], sizes = [2, 8, 8], strides = [1, 1, 1]} : vector<2x8x32xf32> to vector<2x8x8xf32>
    "tpu.trace_start"() <{level = 10 : i32, message = "bqd,bkd->bqk"}> : () -> ()
    %cst_61 = arith.constant dense<0.000000e+00> : vector<2x8x8xf32>
    %73 = tpu.matmul %70, %71, %cst_61 {dimension_numbers = #tpu.dot_dimension_numbers<[2], [2], [1], [1], [0, 0, 0, 1, 1, 1], [0], [0]>} : vector<2x8x8xf32>, vector<2x8x8xf32>, vector<2x8x8xf32> -> vector<2x8x8xf32>
    "tpu.trace_stop"() : () -> ()
    %74 = arith.addf %73, %4 : vector<2x8x8xf32>
    %cst_62 = arith.constant dense<0xFF800000> : vector<2x8xf32>
    %75 = vector.multi_reduction <maximumf>, %74, %cst_62 [2] : vector<2x8x8xf32> to vector<2x8xf32>
    %76 = vector.shape_cast %75 : vector<2x8xf32> to vector<2x8x1xf32>
    %77 = vector.broadcast %76 : vector<2x8x1xf32> to vector<2x8x8xf32>
    %78 = arith.subf %74, %77 : vector<2x8x8xf32>
    %79 = math.exp %78 : vector<2x8x8xf32>
    %cst_63 = arith.constant dense<0.000000e+00> : vector<2x8xf32>
    %80 = vector.multi_reduction <add>, %79, %cst_63 [2] : vector<2x8x8xf32> to vector<2x8xf32>
    %81 = vector.shape_cast %80 : vector<2x8xf32> to vector<2x8x1xf32>
    %82 = tpu.reciprocal %81 {approx = true} : vector<2x8x1xf32> -> vector<2x8x1xf32>
    %83 = vector.broadcast %82 : vector<2x8x1xf32> to vector<2x8x8xf32>
    %84 = arith.mulf %79, %83 : vector<2x8x8xf32>
    "tpu.trace_start"() <{level = 10 : i32, message = "bqk,bkd->bqd"}> : () -> ()
    %cst_64 = arith.constant dense<0.000000e+00> : vector<2x8x8xf32>
    %85 = tpu.matmul %84, %72, %cst_64 {dimension_numbers = #tpu.dot_dimension_numbers<[2], [1], [1], [2], [0, 0, 0, 1, 1, 2], [0], [0]>} : vector<2x8x8xf32>, vector<2x8x8xf32>, vector<2x8x8xf32> -> vector<2x8x8xf32>
    "tpu.trace_stop"() : () -> ()
    %86 = vector.shape_cast %85 : vector<2x8x8xf32> to vector<16x8xf32>
    %87 = vector.extract_strided_slice %18 {offsets = [8, 0], sizes = [8, 32], strides = [1, 1]} : vector<32x32xf32> to vector<8x32xf32>
    %cst_65 = arith.constant dense<0.000000e+00> : vector<16x32xf32>
    %88 = tpu.matmul %86, %87, %cst_65 {dimension_numbers = #tpu.dot_dimension_numbers<[1], [0], [0], [1], [0, 0, 1, 1], [], []>} : vector<16x8xf32>, vector<8x32xf32>, vector<16x32xf32> -> vector<16x32xf32>
    %89 = arith.addf %69, %88 : vector<16x32xf32>
    %90 = vector.extract_strided_slice %46 {offsets = [0, 0, 16], sizes = [2, 8, 8], strides = [1, 1, 1]} : vector<2x8x32xf32> to vector<2x8x8xf32>
    %91 = vector.extract_strided_slice %47 {offsets = [0, 0, 16], sizes = [2, 8, 8], strides = [1, 1, 1]} : vector<2x8x32xf32> to vector<2x8x8xf32>
    %92 = vector.extract_strided_slice %48 {offsets = [0, 0, 16], sizes = [2, 8, 8], strides = [1, 1, 1]} : vector<2x8x32xf32> to vector<2x8x8xf32>
    "tpu.trace_start"() <{level = 10 : i32, message = "bqd,bkd->bqk"}> : () -> ()
    %cst_66 = arith.constant dense<0.000000e+00> : vector<2x8x8xf32>
    %93 = tpu.matmul %90, %91, %cst_66 {dimension_numbers = #tpu.dot_dimension_numbers<[2], [2], [1], [1], [0, 0, 0, 1, 1, 1], [0], [0]>} : vector<2x8x8xf32>, vector<2x8x8xf32>, vector<2x8x8xf32> -> vector<2x8x8xf32>
    "tpu.trace_stop"() : () -> ()
    %94 = arith.addf %93, %4 : vector<2x8x8xf32>
    %cst_67 = arith.constant dense<0xFF800000> : vector<2x8xf32>
    %95 = vector.multi_reduction <maximumf>, %94, %cst_67 [2] : vector<2x8x8xf32> to vector<2x8xf32>
    %96 = vector.shape_cast %95 : vector<2x8xf32> to vector<2x8x1xf32>
    %97 = vector.broadcast %96 : vector<2x8x1xf32> to vector<2x8x8xf32>
    %98 = arith.subf %94, %97 : vector<2x8x8xf32>
    %99 = math.exp %98 : vector<2x8x8xf32>
    %cst_68 = arith.constant dense<0.000000e+00> : vector<2x8xf32>
    %100 = vector.multi_reduction <add>, %99, %cst_68 [2] : vector<2x8x8xf32> to vector<2x8xf32>
    %101 = vector.shape_cast %100 : vector<2x8xf32> to vector<2x8x1xf32>
    %102 = tpu.reciprocal %101 {approx = true} : vector<2x8x1xf32> -> vector<2x8x1xf32>
    %103 = vector.broadcast %102 : vector<2x8x1xf32> to vector<2x8x8xf32>
    %104 = arith.mulf %99, %103 : vector<2x8x8xf32>
    "tpu.trace_start"() <{level = 10 : i32, message = "bqk,bkd->bqd"}> : () -> ()
    %cst_69 = arith.constant dense<0.000000e+00> : vector<2x8x8xf32>
    %105 = tpu.matmul %104, %92, %cst_69 {dimension_numbers = #tpu.dot_dimension_numbers<[2], [1], [1], [2], [0, 0, 0, 1, 1, 2], [0], [0]>} : vector<2x8x8xf32>, vector<2x8x8xf32>, vector<2x8x8xf32> -> vector<2x8x8xf32>
    "tpu.trace_stop"() : () -> ()
    %106 = vector.shape_cast %105 : vector<2x8x8xf32> to vector<16x8xf32>
    %107 = vector.extract_strided_slice %18 {offsets = [16, 0], sizes = [8, 32], strides = [1, 1]} : vector<32x32xf32> to vector<8x32xf32>
    %cst_70 = arith.constant dense<0.000000e+00> : vector<16x32xf32>
    %108 = tpu.matmul %106, %107, %cst_70 {dimension_numbers = #tpu.dot_dimension_numbers<[1], [0], [0], [1], [0, 0, 1, 1], [], []>} : vector<16x8xf32>, vector<8x32xf32>, vector<16x32xf32> -> vector<16x32xf32>
    %109 = arith.addf %89, %108 : vector<16x32xf32>
    %110 = vector.extract_strided_slice %46 {offsets = [0, 0, 24], sizes = [2, 8, 8], strides = [1, 1, 1]} : vector<2x8x32xf32> to vector<2x8x8xf32>
    %111 = vector.extract_strided_slice %47 {offsets = [0, 0, 24], sizes = [2, 8, 8], strides = [1, 1, 1]} : vector<2x8x32xf32> to vector<2x8x8xf32>
    %112 = vector.extract_strided_slice %48 {offsets = [0, 0, 24], sizes = [2, 8, 8], strides = [1, 1, 1]} : vector<2x8x32xf32> to vector<2x8x8xf32>
    "tpu.trace_start"() <{level = 10 : i32, message = "bqd,bkd->bqk"}> : () -> ()
    %cst_71 = arith.constant dense<0.000000e+00> : vector<2x8x8xf32>
    %113 = tpu.matmul %110, %111, %cst_71 {dimension_numbers = #tpu.dot_dimension_numbers<[2], [2], [1], [1], [0, 0, 0, 1, 1, 1], [0], [0]>} : vector<2x8x8xf32>, vector<2x8x8xf32>, vector<2x8x8xf32> -> vector<2x8x8xf32>
    "tpu.trace_stop"() : () -> ()
    %114 = arith.addf %113, %4 : vector<2x8x8xf32>
    %cst_72 = arith.constant dense<0xFF800000> : vector<2x8xf32>
    %115 = vector.multi_reduction <maximumf>, %114, %cst_72 [2] : vector<2x8x8xf32> to vector<2x8xf32>
    %116 = vector.shape_cast %115 : vector<2x8xf32> to vector<2x8x1xf32>
    %117 = vector.broadcast %116 : vector<2x8x1xf32> to vector<2x8x8xf32>
    %118 = arith.subf %114, %117 : vector<2x8x8xf32>
    %119 = math.exp %118 : vector<2x8x8xf32>
    %cst_73 = arith.constant dense<0.000000e+00> : vector<2x8xf32>
    %120 = vector.multi_reduction <add>, %119, %cst_73 [2] : vector<2x8x8xf32> to vector<2x8xf32>
    %121 = vector.shape_cast %120 : vector<2x8xf32> to vector<2x8x1xf32>
    %122 = tpu.reciprocal %121 {approx = true} : vector<2x8x1xf32> -> vector<2x8x1xf32>
    %123 = vector.broadcast %122 : vector<2x8x1xf32> to vector<2x8x8xf32>
    %124 = arith.mulf %119, %123 : vector<2x8x8xf32>
    "tpu.trace_start"() <{level = 10 : i32, message = "bqk,bkd->bqd"}> : () -> ()
    %cst_74 = arith.constant dense<0.000000e+00> : vector<2x8x8xf32>
    %125 = tpu.matmul %124, %112, %cst_74 {dimension_numbers = #tpu.dot_dimension_numbers<[2], [1], [1], [2], [0, 0, 0, 1, 1, 2], [0], [0]>} : vector<2x8x8xf32>, vector<2x8x8xf32>, vector<2x8x8xf32> -> vector<2x8x8xf32>
    "tpu.trace_stop"() : () -> ()
    %126 = vector.shape_cast %125 : vector<2x8x8xf32> to vector<16x8xf32>
    %127 = vector.extract_strided_slice %18 {offsets = [24, 0], sizes = [8, 32], strides = [1, 1]} : vector<32x32xf32> to vector<8x32xf32>
    %cst_75 = arith.constant dense<0.000000e+00> : vector<16x32xf32>
    %128 = tpu.matmul %126, %127, %cst_75 {dimension_numbers = #tpu.dot_dimension_numbers<[1], [0], [0], [1], [0, 0, 1, 1], [], []>} : vector<16x8xf32>, vector<8x32xf32>, vector<16x32xf32> -> vector<16x32xf32>
    %129 = arith.addf %109, %128 : vector<16x32xf32>
    %130 = vector.broadcast %20 : vector<1x32xf32> to vector<16x32xf32>
    %131 = arith.addf %129, %130 : vector<16x32xf32>
    %132 = arith.addf %1, %131 : vector<16x32xf32>
    %cst_76 = arith.constant dense<0.000000e+00> : vector<16xf32>
    %133 = vector.multi_reduction <add>, %132, %cst_76 [1] : vector<16x32xf32> to vector<16xf32>
    %134 = vector.shape_cast %133 : vector<16xf32> to vector<16x1xf32>
    %cst_77 = arith.constant 3.200000e+01 : f32
    %135 = vector.broadcast %cst_77 : f32 to vector<16x1xf32>
    %136 = arith.divf %134, %135 : vector<16x1xf32>
    %137 = vector.broadcast %136 : vector<16x1xf32> to vector<16x32xf32>
    %138 = arith.subf %132, %137 : vector<16x32xf32>
    %139 = arith.mulf %138, %138 : vector<16x32xf32>
    %cst_78 = arith.constant dense<0.000000e+00> : vector<16xf32>
    %140 = vector.multi_reduction <add>, %139, %cst_78 [1] : vector<16x32xf32> to vector<16xf32>
    %141 = vector.shape_cast %140 : vector<16xf32> to vector<16x1xf32>
    %cst_79 = arith.constant 3.200000e+01 : f32
    %142 = vector.broadcast %cst_79 : f32 to vector<16x1xf32>
    %143 = arith.divf %141, %142 : vector<16x1xf32>
    %144 = vector.broadcast %136 : vector<16x1xf32> to vector<16x32xf32>
    %145 = arith.subf %132, %144 : vector<16x32xf32>
    %cst_80 = arith.constant 9.99999974E-6 : f32
    %146 = vector.broadcast %cst_80 : f32 to vector<16x1xf32>
    %147 = arith.addf %143, %146 : vector<16x1xf32>
    %148 = math.rsqrt %147 : vector<16x1xf32>
    %149 = vector.broadcast %148 : vector<16x1xf32> to vector<16x32xf32>
    %150 = arith.mulf %145, %149 : vector<16x32xf32>
    %151 = vector.broadcast %22 : vector<1x32xf32> to vector<16x32xf32>
    %152 = arith.mulf %150, %151 : vector<16x32xf32>
    %153 = vector.broadcast %24 : vector<1x32xf32> to vector<16x32xf32>
    %154 = arith.addf %152, %153 : vector<16x32xf32>
    %cst_81 = arith.constant dense<0.000000e+00> : vector<16x64xf32>
    %155 = tpu.matmul %154, %26, %cst_81 {dimension_numbers = #tpu.dot_dimension_numbers<[1], [0], [0], [1], [0, 0, 1, 1], [], []>} : vector<16x32xf32>, vector<32x64xf32>, vector<16x64xf32> -> vector<16x64xf32>
    %156 = vector.broadcast %28 : vector<1x64xf32> to vector<16x64xf32>
    %157 = arith.addf %155, %156 : vector<16x64xf32>
    %cst_82 = arith.constant 0.000000e+00 : f32
    %158 = vector.broadcast %cst_82 : f32 to vector<16x64xf32>
    %159 = arith.maximumf %157, %158 : vector<16x64xf32>
    %cst_83 = arith.constant dense<0.000000e+00> : vector<16x32xf32>
    %160 = tpu.matmul %159, %30, %cst_83 {dimension_numbers = #tpu.dot_dimension_numbers<[1], [0], [0], [1], [0, 0, 1, 1], [], []>} : vector<16x64xf32>, vector<64x32xf32>, vector<16x32xf32> -> vector<16x32xf32>
    %161 = vector.broadcast %32 : vector<1x32xf32> to vector<16x32xf32>
    %162 = arith.addf %160, %161 : vector<16x32xf32>
    %163 = arith.addf %154, %162 : vector<16x32xf32>
    %cst_84 = arith.constant dense<0.000000e+00> : vector<16xf32>
    %164 = vector.multi_reduction <add>, %163, %cst_84 [1] : vector<16x32xf32> to vector<16xf32>
    %165 = vector.shape_cast %164 : vector<16xf32> to vector<16x1xf32>
    %cst_85 = arith.constant 3.200000e+01 : f32
    %166 = vector.broadcast %cst_85 : f32 to vector<16x1xf32>
    %167 = arith.divf %165, %166 : vector<16x1xf32>
    %168 = vector.broadcast %167 : vector<16x1xf32> to vector<16x32xf32>
    %169 = arith.subf %163, %168 : vector<16x32xf32>
    %170 = arith.mulf %169, %169 : vector<16x32xf32>
    %cst_86 = arith.constant dense<0.000000e+00> : vector<16xf32>
    %171 = vector.multi_reduction <add>, %170, %cst_86 [1] : vector<16x32xf32> to vector<16xf32>
    %172 = vector.shape_cast %171 : vector<16xf32> to vector<16x1xf32>
    %cst_87 = arith.constant 3.200000e+01 : f32
    %173 = vector.broadcast %cst_87 : f32 to vector<16x1xf32>
    %174 = arith.divf %172, %173 : vector<16x1xf32>
    %175 = vector.broadcast %167 : vector<16x1xf32> to vector<16x32xf32>
    %176 = arith.subf %163, %175 : vector<16x32xf32>
    %cst_88 = arith.constant 9.99999974E-6 : f32
    %177 = vector.broadcast %cst_88 : f32 to vector<16x1xf32>
    %178 = arith.addf %174, %177 : vector<16x1xf32>
    %179 = math.rsqrt %178 : vector<16x1xf32>
    %180 = vector.broadcast %179 : vector<16x1xf32> to vector<16x32xf32>
    %181 = arith.mulf %176, %180 : vector<16x32xf32>
    %182 = vector.broadcast %34 : vector<1x32xf32> to vector<16x32xf32>
    %183 = arith.mulf %181, %182 : vector<16x32xf32>
    %184 = vector.broadcast %36 : vector<1x32xf32> to vector<16x32xf32>
    %185 = arith.addf %183, %184 : vector<16x32xf32>
    %c1 = arith.constant 1 : index
    %c0_89 = arith.constant 0 : index
    %c0_90 = arith.constant 0 : index
    %186 = vector.load %arg2[%c1, %c0_89, %c0_90] : memref<2x32x32xf32, #tpu.memory_space<vmem>>, vector<1x32x32xf32>
    %187 = vector.shape_cast %186 : vector<1x32x32xf32> to vector<32x32xf32>
    %c1_91 = arith.constant 1 : index
    %c0_92 = arith.constant 0 : index
    %c0_93 = arith.constant 0 : index
    %188 = vector.load %arg3[%c1_91, %c0_92, %c0_93] : memref<2x1x32xf32, #tpu.memory_space<vmem>>, vector<1x1x32xf32>
    %189 = vector.shape_cast %188 : vector<1x1x32xf32> to vector<1x32xf32>
    %c1_94 = arith.constant 1 : index
    %c0_95 = arith.constant 0 : index
    %c0_96 = arith.constant 0 : index
    %190 = vector.load %arg4[%c1_94, %c0_95, %c0_96] : memref<2x32x32xf32, #tpu.memory_space<vmem>>, vector<1x32x32xf32>
    %191 = vector.shape_cast %190 : vector<1x32x32xf32> to vector<32x32xf32>
    %c1_97 = arith.constant 1 : index
    %c0_98 = arith.constant 0 : index
    %c0_99 = arith.constant 0 : index
    %192 = vector.load %arg5[%c1_97, %c0_98, %c0_99] : memref<2x1x32xf32, #tpu.memory_space<vmem>>, vector<1x1x32xf32>
    %193 = vector.shape_cast %192 : vector<1x1x32xf32> to vector<1x32xf32>
    %c1_100 = arith.constant 1 : index
    %c0_101 = arith.constant 0 : index
    %c0_102 = arith.constant 0 : index
    %194 = vector.load %arg6[%c1_100, %c0_101, %c0_102] : memref<2x32x32xf32, #tpu.memory_space<vmem>>, vector<1x32x32xf32>
    %195 = vector.shape_cast %194 : vector<1x32x32xf32> to vector<32x32xf32>
    %c1_103 = arith.constant 1 : index
    %c0_104 = arith.constant 0 : index
    %c0_105 = arith.constant 0 : index
    %196 = vector.load %arg7[%c1_103, %c0_104, %c0_105] : memref<2x1x32xf32, #tpu.memory_space<vmem>>, vector<1x1x32xf32>
    %197 = vector.shape_cast %196 : vector<1x1x32xf32> to vector<1x32xf32>
    %c1_106 = arith.constant 1 : index
    %c0_107 = arith.constant 0 : index
    %c0_108 = arith.constant 0 : index
    %198 = vector.load %arg8[%c1_106, %c0_107, %c0_108] : memref<2x32x32xf32, #tpu.memory_space<vmem>>, vector<1x32x32xf32>
    %199 = vector.shape_cast %198 : vector<1x32x32xf32> to vector<32x32xf32>
    %c1_109 = arith.constant 1 : index
    %c0_110 = arith.constant 0 : index
    %c0_111 = arith.constant 0 : index
    %200 = vector.load %arg9[%c1_109, %c0_110, %c0_111] : memref<2x1x32xf32, #tpu.memory_space<vmem>>, vector<1x1x32xf32>
    %201 = vector.shape_cast %200 : vector<1x1x32xf32> to vector<1x32xf32>
    %c1_112 = arith.constant 1 : index
    %c0_113 = arith.constant 0 : index
    %c0_114 = arith.constant 0 : index
    %202 = vector.load %arg10[%c1_112, %c0_113, %c0_114] : memref<2x1x32xf32, #tpu.memory_space<vmem>>, vector<1x1x32xf32>
    %203 = vector.shape_cast %202 : vector<1x1x32xf32> to vector<1x32xf32>
    %c1_115 = arith.constant 1 : index
    %c0_116 = arith.constant 0 : index
    %c0_117 = arith.constant 0 : index
    %204 = vector.load %arg11[%c1_115, %c0_116, %c0_117] : memref<2x1x32xf32, #tpu.memory_space<vmem>>, vector<1x1x32xf32>
    %205 = vector.shape_cast %204 : vector<1x1x32xf32> to vector<1x32xf32>
    %c1_118 = arith.constant 1 : index
    %c0_119 = arith.constant 0 : index
    %c0_120 = arith.constant 0 : index
    %206 = vector.load %arg12[%c1_118, %c0_119, %c0_120] : memref<2x32x64xf32, #tpu.memory_space<vmem>>, vector<1x32x64xf32>
    %207 = vector.shape_cast %206 : vector<1x32x64xf32> to vector<32x64xf32>
    %c1_121 = arith.constant 1 : index
    %c0_122 = arith.constant 0 : index
    %c0_123 = arith.constant 0 : index
    %208 = vector.load %arg13[%c1_121, %c0_122, %c0_123] : memref<2x1x64xf32, #tpu.memory_space<vmem>>, vector<1x1x64xf32>
    %209 = vector.shape_cast %208 : vector<1x1x64xf32> to vector<1x64xf32>
    %c1_124 = arith.constant 1 : index
    %c0_125 = arith.constant 0 : index
    %c0_126 = arith.constant 0 : index
    %210 = vector.load %arg14[%c1_124, %c0_125, %c0_126] : memref<2x64x32xf32, #tpu.memory_space<vmem>>, vector<1x64x32xf32>
    %211 = vector.shape_cast %210 : vector<1x64x32xf32> to vector<64x32xf32>
    %c1_127 = arith.constant 1 : index
    %c0_128 = arith.constant 0 : index
    %c0_129 = arith.constant 0 : index
    %212 = vector.load %arg15[%c1_127, %c0_128, %c0_129] : memref<2x1x32xf32, #tpu.memory_space<vmem>>, vector<1x1x32xf32>
    %213 = vector.shape_cast %212 : vector<1x1x32xf32> to vector<1x32xf32>
    %c1_130 = arith.constant 1 : index
    %c0_131 = arith.constant 0 : index
    %c0_132 = arith.constant 0 : index
    %214 = vector.load %arg16[%c1_130, %c0_131, %c0_132] : memref<2x1x32xf32, #tpu.memory_space<vmem>>, vector<1x1x32xf32>
    %215 = vector.shape_cast %214 : vector<1x1x32xf32> to vector<1x32xf32>
    %c1_133 = arith.constant 1 : index
    %c0_134 = arith.constant 0 : index
    %c0_135 = arith.constant 0 : index
    %216 = vector.load %arg17[%c1_133, %c0_134, %c0_135] : memref<2x1x32xf32, #tpu.memory_space<vmem>>, vector<1x1x32xf32>
    %217 = vector.shape_cast %216 : vector<1x1x32xf32> to vector<1x32xf32>
    %cst_136 = arith.constant dense<0.000000e+00> : vector<16x32xf32>
    %218 = tpu.matmul %185, %187, %cst_136 {dimension_numbers = #tpu.dot_dimension_numbers<[1], [0], [0], [1], [0, 0, 1, 1], [], []>} : vector<16x32xf32>, vector<32x32xf32>, vector<16x32xf32> -> vector<16x32xf32>
    %219 = vector.broadcast %189 : vector<1x32xf32> to vector<16x32xf32>
    %220 = arith.addf %218, %219 : vector<16x32xf32>
    %cst_137 = arith.constant dense<0.000000e+00> : vector<16x32xf32>
    %221 = tpu.matmul %185, %191, %cst_137 {dimension_numbers = #tpu.dot_dimension_numbers<[1], [0], [0], [1], [0, 0, 1, 1], [], []>} : vector<16x32xf32>, vector<32x32xf32>, vector<16x32xf32> -> vector<16x32xf32>
    %222 = vector.broadcast %193 : vector<1x32xf32> to vector<16x32xf32>
    %223 = arith.addf %221, %222 : vector<16x32xf32>
    %cst_138 = arith.constant dense<0.000000e+00> : vector<16x32xf32>
    %224 = tpu.matmul %185, %195, %cst_138 {dimension_numbers = #tpu.dot_dimension_numbers<[1], [0], [0], [1], [0, 0, 1, 1], [], []>} : vector<16x32xf32>, vector<32x32xf32>, vector<16x32xf32> -> vector<16x32xf32>
    %225 = vector.broadcast %197 : vector<1x32xf32> to vector<16x32xf32>
    %226 = arith.addf %224, %225 : vector<16x32xf32>
    %227 = vector.shape_cast %220 : vector<16x32xf32> to vector<2x8x32xf32>
    %228 = vector.shape_cast %223 : vector<16x32xf32> to vector<2x8x32xf32>
    %229 = vector.shape_cast %226 : vector<16x32xf32> to vector<2x8x32xf32>
    %cst_139 = arith.constant 0.000000e+00 : f32
    %230 = vector.broadcast %cst_139 : f32 to vector<16x32xf32>
    %231 = vector.extract_strided_slice %227 {offsets = [0, 0, 0], sizes = [2, 8, 8], strides = [1, 1, 1]} : vector<2x8x32xf32> to vector<2x8x8xf32>
    %232 = vector.extract_strided_slice %228 {offsets = [0, 0, 0], sizes = [2, 8, 8], strides = [1, 1, 1]} : vector<2x8x32xf32> to vector<2x8x8xf32>
    %233 = vector.extract_strided_slice %229 {offsets = [0, 0, 0], sizes = [2, 8, 8], strides = [1, 1, 1]} : vector<2x8x32xf32> to vector<2x8x8xf32>
    "tpu.trace_start"() <{level = 10 : i32, message = "bqd,bkd->bqk"}> : () -> ()
    %cst_140 = arith.constant dense<0.000000e+00> : vector<2x8x8xf32>
    %234 = tpu.matmul %231, %232, %cst_140 {dimension_numbers = #tpu.dot_dimension_numbers<[2], [2], [1], [1], [0, 0, 0, 1, 1, 1], [0], [0]>} : vector<2x8x8xf32>, vector<2x8x8xf32>, vector<2x8x8xf32> -> vector<2x8x8xf32>
    "tpu.trace_stop"() : () -> ()
    %235 = arith.addf %234, %4 : vector<2x8x8xf32>
    %cst_141 = arith.constant dense<0xFF800000> : vector<2x8xf32>
    %236 = vector.multi_reduction <maximumf>, %235, %cst_141 [2] : vector<2x8x8xf32> to vector<2x8xf32>
    %237 = vector.shape_cast %236 : vector<2x8xf32> to vector<2x8x1xf32>
    %238 = vector.broadcast %237 : vector<2x8x1xf32> to vector<2x8x8xf32>
    %239 = arith.subf %235, %238 : vector<2x8x8xf32>
    %240 = math.exp %239 : vector<2x8x8xf32>
    %cst_142 = arith.constant dense<0.000000e+00> : vector<2x8xf32>
    %241 = vector.multi_reduction <add>, %240, %cst_142 [2] : vector<2x8x8xf32> to vector<2x8xf32>
    %242 = vector.shape_cast %241 : vector<2x8xf32> to vector<2x8x1xf32>
    %243 = tpu.reciprocal %242 {approx = true} : vector<2x8x1xf32> -> vector<2x8x1xf32>
    %244 = vector.broadcast %243 : vector<2x8x1xf32> to vector<2x8x8xf32>
    %245 = arith.mulf %240, %244 : vector<2x8x8xf32>
    "tpu.trace_start"() <{level = 10 : i32, message = "bqk,bkd->bqd"}> : () -> ()
    %cst_143 = arith.constant dense<0.000000e+00> : vector<2x8x8xf32>
    %246 = tpu.matmul %245, %233, %cst_143 {dimension_numbers = #tpu.dot_dimension_numbers<[2], [1], [1], [2], [0, 0, 0, 1, 1, 2], [0], [0]>} : vector<2x8x8xf32>, vector<2x8x8xf32>, vector<2x8x8xf32> -> vector<2x8x8xf32>
    "tpu.trace_stop"() : () -> ()
    %247 = vector.shape_cast %246 : vector<2x8x8xf32> to vector<16x8xf32>
    %248 = vector.extract_strided_slice %199 {offsets = [0, 0], sizes = [8, 32], strides = [1, 1]} : vector<32x32xf32> to vector<8x32xf32>
    %cst_144 = arith.constant dense<0.000000e+00> : vector<16x32xf32>
    %249 = tpu.matmul %247, %248, %cst_144 {dimension_numbers = #tpu.dot_dimension_numbers<[1], [0], [0], [1], [0, 0, 1, 1], [], []>} : vector<16x8xf32>, vector<8x32xf32>, vector<16x32xf32> -> vector<16x32xf32>
    %250 = arith.addf %230, %249 : vector<16x32xf32>
    %251 = vector.extract_strided_slice %227 {offsets = [0, 0, 8], sizes = [2, 8, 8], strides = [1, 1, 1]} : vector<2x8x32xf32> to vector<2x8x8xf32>
    %252 = vector.extract_strided_slice %228 {offsets = [0, 0, 8], sizes = [2, 8, 8], strides = [1, 1, 1]} : vector<2x8x32xf32> to vector<2x8x8xf32>
    %253 = vector.extract_strided_slice %229 {offsets = [0, 0, 8], sizes = [2, 8, 8], strides = [1, 1, 1]} : vector<2x8x32xf32> to vector<2x8x8xf32>
    "tpu.trace_start"() <{level = 10 : i32, message = "bqd,bkd->bqk"}> : () -> ()
    %cst_145 = arith.constant dense<0.000000e+00> : vector<2x8x8xf32>
    %254 = tpu.matmul %251, %252, %cst_145 {dimension_numbers = #tpu.dot_dimension_numbers<[2], [2], [1], [1], [0, 0, 0, 1, 1, 1], [0], [0]>} : vector<2x8x8xf32>, vector<2x8x8xf32>, vector<2x8x8xf32> -> vector<2x8x8xf32>
    "tpu.trace_stop"() : () -> ()
    %255 = arith.addf %254, %4 : vector<2x8x8xf32>
    %cst_146 = arith.constant dense<0xFF800000> : vector<2x8xf32>
    %256 = vector.multi_reduction <maximumf>, %255, %cst_146 [2] : vector<2x8x8xf32> to vector<2x8xf32>
    %257 = vector.shape_cast %256 : vector<2x8xf32> to vector<2x8x1xf32>
    %258 = vector.broadcast %257 : vector<2x8x1xf32> to vector<2x8x8xf32>
    %259 = arith.subf %255, %258 : vector<2x8x8xf32>
    %260 = math.exp %259 : vector<2x8x8xf32>
    %cst_147 = arith.constant dense<0.000000e+00> : vector<2x8xf32>
    %261 = vector.multi_reduction <add>, %260, %cst_147 [2] : vector<2x8x8xf32> to vector<2x8xf32>
    %262 = vector.shape_cast %261 : vector<2x8xf32> to vector<2x8x1xf32>
    %263 = tpu.reciprocal %262 {approx = true} : vector<2x8x1xf32> -> vector<2x8x1xf32>
    %264 = vector.broadcast %263 : vector<2x8x1xf32> to vector<2x8x8xf32>
    %265 = arith.mulf %260, %264 : vector<2x8x8xf32>
    "tpu.trace_start"() <{level = 10 : i32, message = "bqk,bkd->bqd"}> : () -> ()
    %cst_148 = arith.constant dense<0.000000e+00> : vector<2x8x8xf32>
    %266 = tpu.matmul %265, %253, %cst_148 {dimension_numbers = #tpu.dot_dimension_numbers<[2], [1], [1], [2], [0, 0, 0, 1, 1, 2], [0], [0]>} : vector<2x8x8xf32>, vector<2x8x8xf32>, vector<2x8x8xf32> -> vector<2x8x8xf32>
    "tpu.trace_stop"() : () -> ()
    %267 = vector.shape_cast %266 : vector<2x8x8xf32> to vector<16x8xf32>
    %268 = vector.extract_strided_slice %199 {offsets = [8, 0], sizes = [8, 32], strides = [1, 1]} : vector<32x32xf32> to vector<8x32xf32>
    %cst_149 = arith.constant dense<0.000000e+00> : vector<16x32xf32>
    %269 = tpu.matmul %267, %268, %cst_149 {dimension_numbers = #tpu.dot_dimension_numbers<[1], [0], [0], [1], [0, 0, 1, 1], [], []>} : vector<16x8xf32>, vector<8x32xf32>, vector<16x32xf32> -> vector<16x32xf32>
    %270 = arith.addf %250, %269 : vector<16x32xf32>
    %271 = vector.extract_strided_slice %227 {offsets = [0, 0, 16], sizes = [2, 8, 8], strides = [1, 1, 1]} : vector<2x8x32xf32> to vector<2x8x8xf32>
    %272 = vector.extract_strided_slice %228 {offsets = [0, 0, 16], sizes = [2, 8, 8], strides = [1, 1, 1]} : vector<2x8x32xf32> to vector<2x8x8xf32>
    %273 = vector.extract_strided_slice %229 {offsets = [0, 0, 16], sizes = [2, 8, 8], strides = [1, 1, 1]} : vector<2x8x32xf32> to vector<2x8x8xf32>
    "tpu.trace_start"() <{level = 10 : i32, message = "bqd,bkd->bqk"}> : () -> ()
    %cst_150 = arith.constant dense<0.000000e+00> : vector<2x8x8xf32>
    %274 = tpu.matmul %271, %272, %cst_150 {dimension_numbers = #tpu.dot_dimension_numbers<[2], [2], [1], [1], [0, 0, 0, 1, 1, 1], [0], [0]>} : vector<2x8x8xf32>, vector<2x8x8xf32>, vector<2x8x8xf32> -> vector<2x8x8xf32>
    "tpu.trace_stop"() : () -> ()
    %275 = arith.addf %274, %4 : vector<2x8x8xf32>
    %cst_151 = arith.constant dense<0xFF800000> : vector<2x8xf32>
    %276 = vector.multi_reduction <maximumf>, %275, %cst_151 [2] : vector<2x8x8xf32> to vector<2x8xf32>
    %277 = vector.shape_cast %276 : vector<2x8xf32> to vector<2x8x1xf32>
    %278 = vector.broadcast %277 : vector<2x8x1xf32> to vector<2x8x8xf32>
    %279 = arith.subf %275, %278 : vector<2x8x8xf32>
    %280 = math.exp %279 : vector<2x8x8xf32>
    %cst_152 = arith.constant dense<0.000000e+00> : vector<2x8xf32>
    %281 = vector.multi_reduction <add>, %280, %cst_152 [2] : vector<2x8x8xf32> to vector<2x8xf32>
    %282 = vector.shape_cast %281 : vector<2x8xf32> to vector<2x8x1xf32>
    %283 = tpu.reciprocal %282 {approx = true} : vector<2x8x1xf32> -> vector<2x8x1xf32>
    %284 = vector.broadcast %283 : vector<2x8x1xf32> to vector<2x8x8xf32>
    %285 = arith.mulf %280, %284 : vector<2x8x8xf32>
    "tpu.trace_start"() <{level = 10 : i32, message = "bqk,bkd->bqd"}> : () -> ()
    %cst_153 = arith.constant dense<0.000000e+00> : vector<2x8x8xf32>
    %286 = tpu.matmul %285, %273, %cst_153 {dimension_numbers = #tpu.dot_dimension_numbers<[2], [1], [1], [2], [0, 0, 0, 1, 1, 2], [0], [0]>} : vector<2x8x8xf32>, vector<2x8x8xf32>, vector<2x8x8xf32> -> vector<2x8x8xf32>
    "tpu.trace_stop"() : () -> ()
    %287 = vector.shape_cast %286 : vector<2x8x8xf32> to vector<16x8xf32>
    %288 = vector.extract_strided_slice %199 {offsets = [16, 0], sizes = [8, 32], strides = [1, 1]} : vector<32x32xf32> to vector<8x32xf32>
    %cst_154 = arith.constant dense<0.000000e+00> : vector<16x32xf32>
    %289 = tpu.matmul %287, %288, %cst_154 {dimension_numbers = #tpu.dot_dimension_numbers<[1], [0], [0], [1], [0, 0, 1, 1], [], []>} : vector<16x8xf32>, vector<8x32xf32>, vector<16x32xf32> -> vector<16x32xf32>
    %290 = arith.addf %270, %289 : vector<16x32xf32>
    %291 = vector.extract_strided_slice %227 {offsets = [0, 0, 24], sizes = [2, 8, 8], strides = [1, 1, 1]} : vector<2x8x32xf32> to vector<2x8x8xf32>
    %292 = vector.extract_strided_slice %228 {offsets = [0, 0, 24], sizes = [2, 8, 8], strides = [1, 1, 1]} : vector<2x8x32xf32> to vector<2x8x8xf32>
    %293 = vector.extract_strided_slice %229 {offsets = [0, 0, 24], sizes = [2, 8, 8], strides = [1, 1, 1]} : vector<2x8x32xf32> to vector<2x8x8xf32>
    "tpu.trace_start"() <{level = 10 : i32, message = "bqd,bkd->bqk"}> : () -> ()
    %cst_155 = arith.constant dense<0.000000e+00> : vector<2x8x8xf32>
    %294 = tpu.matmul %291, %292, %cst_155 {dimension_numbers = #tpu.dot_dimension_numbers<[2], [2], [1], [1], [0, 0, 0, 1, 1, 1], [0], [0]>} : vector<2x8x8xf32>, vector<2x8x8xf32>, vector<2x8x8xf32> -> vector<2x8x8xf32>
    "tpu.trace_stop"() : () -> ()
    %295 = arith.addf %294, %4 : vector<2x8x8xf32>
    %cst_156 = arith.constant dense<0xFF800000> : vector<2x8xf32>
    %296 = vector.multi_reduction <maximumf>, %295, %cst_156 [2] : vector<2x8x8xf32> to vector<2x8xf32>
    %297 = vector.shape_cast %296 : vector<2x8xf32> to vector<2x8x1xf32>
    %298 = vector.broadcast %297 : vector<2x8x1xf32> to vector<2x8x8xf32>
    %299 = arith.subf %295, %298 : vector<2x8x8xf32>
    %300 = math.exp %299 : vector<2x8x8xf32>
    %cst_157 = arith.constant dense<0.000000e+00> : vector<2x8xf32>
    %301 = vector.multi_reduction <add>, %300, %cst_157 [2] : vector<2x8x8xf32> to vector<2x8xf32>
    %302 = vector.shape_cast %301 : vector<2x8xf32> to vector<2x8x1xf32>
    %303 = tpu.reciprocal %302 {approx = true} : vector<2x8x1xf32> -> vector<2x8x1xf32>
    %304 = vector.broadcast %303 : vector<2x8x1xf32> to vector<2x8x8xf32>
    %305 = arith.mulf %300, %304 : vector<2x8x8xf32>
    "tpu.trace_start"() <{level = 10 : i32, message = "bqk,bkd->bqd"}> : () -> ()
    %cst_158 = arith.constant dense<0.000000e+00> : vector<2x8x8xf32>
    %306 = tpu.matmul %305, %293, %cst_158 {dimension_numbers = #tpu.dot_dimension_numbers<[2], [1], [1], [2], [0, 0, 0, 1, 1, 2], [0], [0]>} : vector<2x8x8xf32>, vector<2x8x8xf32>, vector<2x8x8xf32> -> vector<2x8x8xf32>
    "tpu.trace_stop"() : () -> ()
    %307 = vector.shape_cast %306 : vector<2x8x8xf32> to vector<16x8xf32>
    %308 = vector.extract_strided_slice %199 {offsets = [24, 0], sizes = [8, 32], strides = [1, 1]} : vector<32x32xf32> to vector<8x32xf32>
    %cst_159 = arith.constant dense<0.000000e+00> : vector<16x32xf32>
    %309 = tpu.matmul %307, %308, %cst_159 {dimension_numbers = #tpu.dot_dimension_numbers<[1], [0], [0], [1], [0, 0, 1, 1], [], []>} : vector<16x8xf32>, vector<8x32xf32>, vector<16x32xf32> -> vector<16x32xf32>
    %310 = arith.addf %290, %309 : vector<16x32xf32>
    %311 = vector.broadcast %201 : vector<1x32xf32> to vector<16x32xf32>
    %312 = arith.addf %310, %311 : vector<16x32xf32>
    %313 = arith.addf %185, %312 : vector<16x32xf32>
    %cst_160 = arith.constant dense<0.000000e+00> : vector<16xf32>
    %314 = vector.multi_reduction <add>, %313, %cst_160 [1] : vector<16x32xf32> to vector<16xf32>
    %315 = vector.shape_cast %314 : vector<16xf32> to vector<16x1xf32>
    %cst_161 = arith.constant 3.200000e+01 : f32
    %316 = vector.broadcast %cst_161 : f32 to vector<16x1xf32>
    %317 = arith.divf %315, %316 : vector<16x1xf32>
    %318 = vector.broadcast %317 : vector<16x1xf32> to vector<16x32xf32>
    %319 = arith.subf %313, %318 : vector<16x32xf32>
    %320 = arith.mulf %319, %319 : vector<16x32xf32>
    %cst_162 = arith.constant dense<0.000000e+00> : vector<16xf32>
    %321 = vector.multi_reduction <add>, %320, %cst_162 [1] : vector<16x32xf32> to vector<16xf32>
    %322 = vector.shape_cast %321 : vector<16xf32> to vector<16x1xf32>
    %cst_163 = arith.constant 3.200000e+01 : f32
    %323 = vector.broadcast %cst_163 : f32 to vector<16x1xf32>
    %324 = arith.divf %322, %323 : vector<16x1xf32>
    %325 = vector.broadcast %317 : vector<16x1xf32> to vector<16x32xf32>
    %326 = arith.subf %313, %325 : vector<16x32xf32>
    %cst_164 = arith.constant 9.99999974E-6 : f32
    %327 = vector.broadcast %cst_164 : f32 to vector<16x1xf32>
    %328 = arith.addf %324, %327 : vector<16x1xf32>
    %329 = math.rsqrt %328 : vector<16x1xf32>
    %330 = vector.broadcast %329 : vector<16x1xf32> to vector<16x32xf32>
    %331 = arith.mulf %326, %330 : vector<16x32xf32>
    %332 = vector.broadcast %203 : vector<1x32xf32> to vector<16x32xf32>
    %333 = arith.mulf %331, %332 : vector<16x32xf32>
    %334 = vector.broadcast %205 : vector<1x32xf32> to vector<16x32xf32>
    %335 = arith.addf %333, %334 : vector<16x32xf32>
    %cst_165 = arith.constant dense<0.000000e+00> : vector<16x64xf32>
    %336 = tpu.matmul %335, %207, %cst_165 {dimension_numbers = #tpu.dot_dimension_numbers<[1], [0], [0], [1], [0, 0, 1, 1], [], []>} : vector<16x32xf32>, vector<32x64xf32>, vector<16x64xf32> -> vector<16x64xf32>
    %337 = vector.broadcast %209 : vector<1x64xf32> to vector<16x64xf32>
    %338 = arith.addf %336, %337 : vector<16x64xf32>
    %cst_166 = arith.constant 0.000000e+00 : f32
    %339 = vector.broadcast %cst_166 : f32 to vector<16x64xf32>
    %340 = arith.maximumf %338, %339 : vector<16x64xf32>
    %cst_167 = arith.constant dense<0.000000e+00> : vector<16x32xf32>
    %341 = tpu.matmul %340, %211, %cst_167 {dimension_numbers = #tpu.dot_dimension_numbers<[1], [0], [0], [1], [0, 0, 1, 1], [], []>} : vector<16x64xf32>, vector<64x32xf32>, vector<16x32xf32> -> vector<16x32xf32>
    %342 = vector.broadcast %213 : vector<1x32xf32> to vector<16x32xf32>
    %343 = arith.addf %341, %342 : vector<16x32xf32>
    %344 = arith.addf %335, %343 : vector<16x32xf32>
    %cst_168 = arith.constant dense<0.000000e+00> : vector<16xf32>
    %345 = vector.multi_reduction <add>, %344, %cst_168 [1] : vector<16x32xf32> to vector<16xf32>
    %346 = vector.shape_cast %345 : vector<16xf32> to vector<16x1xf32>
    %cst_169 = arith.constant 3.200000e+01 : f32
    %347 = vector.broadcast %cst_169 : f32 to vector<16x1xf32>
    %348 = arith.divf %346, %347 : vector<16x1xf32>
    %349 = vector.broadcast %348 : vector<16x1xf32> to vector<16x32xf32>
    %350 = arith.subf %344, %349 : vector<16x32xf32>
    %351 = arith.mulf %350, %350 : vector<16x32xf32>
    %cst_170 = arith.constant dense<0.000000e+00> : vector<16xf32>
    %352 = vector.multi_reduction <add>, %351, %cst_170 [1] : vector<16x32xf32> to vector<16xf32>
    %353 = vector.shape_cast %352 : vector<16xf32> to vector<16x1xf32>
    %cst_171 = arith.constant 3.200000e+01 : f32
    %354 = vector.broadcast %cst_171 : f32 to vector<16x1xf32>
    %355 = arith.divf %353, %354 : vector<16x1xf32>
    %356 = vector.broadcast %348 : vector<16x1xf32> to vector<16x32xf32>
    %357 = arith.subf %344, %356 : vector<16x32xf32>
    %cst_172 = arith.constant 9.99999974E-6 : f32
    %358 = vector.broadcast %cst_172 : f32 to vector<16x1xf32>
    %359 = arith.addf %355, %358 : vector<16x1xf32>
    %360 = math.rsqrt %359 : vector<16x1xf32>
    %361 = vector.broadcast %360 : vector<16x1xf32> to vector<16x32xf32>
    %362 = arith.mulf %357, %361 : vector<16x32xf32>
    %363 = vector.broadcast %215 : vector<1x32xf32> to vector<16x32xf32>
    %364 = arith.mulf %362, %363 : vector<16x32xf32>
    %365 = vector.broadcast %217 : vector<1x32xf32> to vector<16x32xf32>
    %366 = arith.addf %364, %365 : vector<16x32xf32>
    %367 = vector.shape_cast %366 : vector<16x32xf32> to vector<2x8x32xf32>
    %c0_173 = arith.constant 0 : index
    %c0_174 = arith.constant 0 : index
    %c0_175 = arith.constant 0 : index
    %368 = vector.load %arg18[%c0_173, %c0_174, %c0_175] : memref<2x8x32xf32, #tpu.memory_space<vmem>>, vector<2x8x32xf32>
    tpu.vector_store %arg18[%c0_173, %c0_174, %c0_175], %367 {strides = array<i32>} : memref<2x8x32xf32, #tpu.memory_space<vmem>>, vector<2x8x32xf32>,
    return
  }
}

</mosaic_0001>

<llo_original>
// kernel: bert_encoder_v2.1
$region0: #{bert_encoder_v2.1}
  #allocation0 [shape = 'u32[]', space=smem, size = 0x4, offset = 0x4, fixed_abs, tag = 'smem constant byte address 0x4 - core index']
  #allocation1 [shape = 'u32[72,128]{1,0:T(1,128)}', space=vmem, size = 0x9000, scoped, tag = 'internal scratch']
  %s0 = inlined_call_operand.hbm [shape: f32[2,8,32], index: 0, kind: input, shape index: {}, may-alias: {0,18}]
  %s1 = inlined_call_operand.vmem [shape: f32[2,1,8], index: 1, kind: input, shape index: {}]
  %s2 = inlined_call_operand.vmem [shape: f32[2,32,32], index: 2, kind: input, shape index: {}]
  %s3 = inlined_call_operand.vmem [shape: f32[2,1,32], index: 3, kind: input, shape index: {}]
  %s4 = inlined_call_operand.vmem [shape: f32[2,32,32], index: 4, kind: input, shape index: {}]
  %s5 = inlined_call_operand.vmem [shape: f32[2,1,32], index: 5, kind: input, shape index: {}]
  %s6 = inlined_call_operand.vmem [shape: f32[2,32,32], index: 6, kind: input, shape index: {}]
  %s7 = inlined_call_operand.vmem [shape: f32[2,1,32], index: 7, kind: input, shape index: {}]
  %s8 = inlined_call_operand.hbm [shape: f32[2,32,32], index: 8, kind: input, shape index: {}]
  %s9 = inlined_call_operand.vmem [shape: f32[2,1,32], index: 9, kind: input, shape index: {}]
  %s10 = inlined_call_operand.vmem [shape: f32[2,1,32], index: 10, kind: input, shape index: {}]
  %s11 = inlined_call_operand.vmem [shape: f32[2,1,32], index: 11, kind: input, shape index: {}]
  %s12 = inlined_call_operand.hbm [shape: f32[2,32,64], index: 12, kind: input, shape index: {}]
  %s13 = inlined_call_operand.vmem [shape: f32[2,1,64], index: 13, kind: input, shape index: {}]
  %s14 = inlined_call_operand.vmem [shape: f32[2,64,32], index: 14, kind: input, shape index: {}]
  %s15 = inlined_call_operand.vmem [shape: f32[2,1,32], index: 15, kind: input, shape index: {}]
  %s16 = inlined_call_operand.vmem [shape: f32[2,1,32], index: 16, kind: input, shape index: {}]
  %s17 = inlined_call_operand.vmem [shape: f32[2,1,32], index: 17, kind: input, shape index: {}]
  %s18 = inlined_call_operand.hbm [shape: f32[2,8,32], index: 18, kind: output, shape index: {}, may-alias: {0,18}]
  %s19 = sld [smem:[#allocation0]]
  $region94: #{bert_encoder_v2.1} parent=0
    _
  %s21 = ssub.s32 1, %s19
  %s22 = scalar_select 0, %s21, %s19
  $region1: #{bert_encoder_v2.1} parent=0
    #allocation2 [shape = 'u8[8192]{0}', space=vmem, size = 0x2000, scoped, tag = 'input window, operand 0, single buffered']
    #allocation3 [shape = 's32[1]{0}', space=sflag, size = 0x4, scoped, tag = 'scoped memory for bert_encoder_v2.1']
    #allocation4 [shape = 's32[1]{0}', space=sflag, size = 0x4, scoped, tag = 'scoped memory for bert_encoder_v2.1']
    #allocation5 [shape = 'u8[32768]{0}', space=vmem, size = 0x8000, scoped, tag = 'input window, operand 8, single buffered']
    #allocation6 [shape = 's32[1]{0}', space=sflag, size = 0x4, scoped, tag = 'scoped memory for bert_encoder_v2.1']
    #allocation7 [shape = 'u8[32768]{0}', space=vmem, size = 0x8000, scoped, tag = 'input window, operand 12, single buffered']
    #allocation8 [shape = 'u8[8192]{0}', space=vmem, size = 0x2000, scoped, tag = 'output window, operand 0, single buffered']
    %23 = vsyncpa [#allocation3], 0
    %24 = vsyncpa [#allocation6], 0
    %25 = vsyncpa [#allocation4], 0
    // Predicated region
    $region2: #{bert_encoder_v2.1} parent=1 // pred_check
      _
    $region3: #{bert_encoder_v2.1} parent=1 // pred_check_branch
      %27 = sbr.rel (0) target = $region5
    $region4: #{bert_encoder_v2.1} parent=1 // pred_region
      %29 = vsyncadd [#allocation3], 0
      %s30 = sshll.u32 %s0, 4
      %s31 = int_to_ptr.hbm [resolvable:$true] %s30
      %s32 = sshll.u32 [#allocation2], 4
      %s33 = int_to_ptr.vmem [resolvable:$true] %s32
      %38 = dma.hbm_to_vmem [thread:$0]  %s31, 256, %s33, [#allocation3], 128, 128, 8
    $region5: #{bert_encoder_v2.1} parent=1 // pred_fallthru
      _
    // Predicated region
    $region6: #{bert_encoder_v2.1} parent=1 // pred_check
      _
    $region7: #{bert_encoder_v2.1} parent=1 // pred_check_branch
      %40 = sbr.rel (0) target = $region9
    $region8: #{bert_encoder_v2.1} parent=1 // pred_region
      _
    $region9: #{bert_encoder_v2.1} parent=1 // pred_fallthru
      _
    // Predicated region
    $region10: #{bert_encoder_v2.1} parent=1 // pred_check
      _
    $region11: #{bert_encoder_v2.1} parent=1 // pred_check_branch
      %42 = sbr.rel (0) target = $region13
    $region12: #{bert_encoder_v2.1} parent=1 // pred_region
      _
    $region13: #{bert_encoder_v2.1} parent=1 // pred_fallthru
      _
    // Predicated region
    $region14: #{bert_encoder_v2.1} parent=1 // pred_check
      _
    $region15: #{bert_encoder_v2.1} parent=1 // pred_check_branch
      %44 = sbr.rel (0) target = $region17
    $region16: #{bert_encoder_v2.1} parent=1 // pred_region
      _
    $region17: #{bert_encoder_v2.1} parent=1 // pred_fallthru
      _
    // Predicated region
    $region18: #{bert_encoder_v2.1} parent=1 // pred_check
      _
    $region19: #{bert_encoder_v2.1} parent=1 // pred_check_branch
      %46 = sbr.rel (0) target = $region21
    $region20: #{bert_encoder_v2.1} parent=1 // pred_region
      _
    $region21: #{bert_encoder_v2.1} parent=1 // pred_fallthru
      _
    // Predicated region
    $region22: #{bert_encoder_v2.1} parent=1 // pred_check
      _
    $region23: #{bert_encoder_v2.1} parent=1 // pred_check_branch
      %48 = sbr.rel (0) target = $region25
    $region24: #{bert_encoder_v2.1} parent=1 // pred_region
      _
    $region25: #{bert_encoder_v2.1} parent=1 // pred_fallthru
      _
    // Predicated region
    $region26: #{bert_encoder_v2.1} parent=1 // pred_check
      _
    $region27: #{bert_encoder_v2.1} parent=1 // pred_check_branch
      %50 = sbr.rel (0) target = $region29
    $region28: #{bert_encoder_v2.1} parent=1 // pred_region
      _
    $region29: #{bert_encoder_v2.1} parent=1 // pred_fallthru
      _
    // Predicated region
    $region30: #{bert_encoder_v2.1} parent=1 // pred_check
      _
    $region31: #{bert_encoder_v2.1} parent=1 // pred_check_branch
      %52 = sbr.rel (0) target = $region33
    $region32: #{bert_encoder_v2.1} parent=1 // pred_region
      _
    $region33: #{bert_encoder_v2.1} parent=1 // pred_fallthru
      _
    // Predicated region
    $region34: #{bert_encoder_v2.1} parent=1 // pred_check
      _
    $region35: #{bert_encoder_v2.1} parent=1 // pred_check_branch
      %54 = sbr.rel (0) target = $region37
    $region36: #{bert_encoder_v2.1} parent=1 // pred_region
      %56 = vsyncadd [#allocation6], 0
      %s57 = sshll.u32 %s8, 4
      %s58 = int_to_ptr.hbm [resolvable:$true] %s57
      %s59 = sshll.u32 [#allocation5], 4
      %s60 = int_to_ptr.vmem [resolvable:$true] %s59
      %65 = dma.hbm_to_vmem [thread:$0]  %s58, 1024, %s60, [#allocation6], 128, 128, 8
    $region37: #{bert_encoder_v2.1} parent=1 // pred_fallthru
      _
    // Predicated region
    $region38: #{bert_encoder_v2.1} parent=1 // pred_check
      _
    $region39: #{bert_encoder_v2.1} parent=1 // pred_check_branch
      %67 = sbr.rel (0) target = $region41
    $region40: #{bert_encoder_v2.1} parent=1 // pred_region
      _
    $region41: #{bert_encoder_v2.1} parent=1 // pred_fallthru
      _
    // Predicated region
    $region42: #{bert_encoder_v2.1} parent=1 // pred_check
      _
    $region43: #{bert_encoder_v2.1} parent=1 // pred_check_branch
      %69 = sbr.rel (0) target = $region45
    $region44: #{bert_encoder_v2.1} parent=1 // pred_region
      _
    $region45: #{bert_encoder_v2.1} parent=1 // pred_fallthru
      _
    // Predicated region
    $region46: #{bert_encoder_v2.1} parent=1 // pred_check
      _
    $region47: #{bert_encoder_v2.1} parent=1 // pred_check_branch
      %71 = sbr.rel (0) target = $region49
    $region48: #{bert_encoder_v2.1} parent=1 // pred_region
      _
    $region49: #{bert_encoder_v2.1} parent=1 // pred_fallthru
      _
    // Predicated region
    $region50: #{bert_encoder_v2.1} parent=1 // pred_check
      _
    $region51: #{bert_encoder_v2.1} parent=1 // pred_check_branch
      %73 = sbr.rel (0) target = $region53
    $region52: #{bert_encoder_v2.1} parent=1 // pred_region
      %75 = vsyncadd [#allocation6], 0
      %s76 = sshll.u32 %s12, 4
      %s77 = int_to_ptr.hbm [resolvable:$true] %s76
      %s78 = sshll.u32 [#allocation7], 4
      %s79 = int_to_ptr.vmem [resolvable:$true] %s78
      %84 = dma.hbm_to_vmem [thread:$0]  %s77, 1024, %s79, [#allocation6], 128, 128, 8
    $region53: #{bert_encoder_v2.1} parent=1 // pred_fallthru
      _
    // Predicated region
    $region54: #{bert_encoder_v2.1} parent=1 // pred_check
      _
    $region55: #{bert_encoder_v2.1} parent=1 // pred_check_branch
      %86 = sbr.rel (0) target = $region57
    $region56: #{bert_encoder_v2.1} parent=1 // pred_region
      _
    $region57: #{bert_encoder_v2.1} parent=1 // pred_fallthru
      _
    // Predicated region
    $region58: #{bert_encoder_v2.1} parent=1 // pred_check
      _
    $region59: #{bert_encoder_v2.1} parent=1 // pred_check_branch
      %88 = sbr.rel (0) target = $region61
    $region60: #{bert_encoder_v2.1} parent=1 // pred_region
      _
    $region61: #{bert_encoder_v2.1} parent=1 // pred_fallthru
      _
    // Predicated region
    $region62: #{bert_encoder_v2.1} parent=1 // pred_check
      _
    $region63: #{bert_encoder_v2.1} parent=1 // pred_check_branch
      %90 = sbr.rel (0) target = $region65
    $region64: #{bert_encoder_v2.1} parent=1 // pred_region
      _
    $region65: #{bert_encoder_v2.1} parent=1 // pred_fallthru
      _
    // Predicated region
    $region66: #{bert_encoder_v2.1} parent=1 // pred_check
      _
    $region67: #{bert_encoder_v2.1} parent=1 // pred_check_branch
      %92 = sbr.rel (0) target = $region69
    $region68: #{bert_encoder_v2.1} parent=1 // pred_region
      _
    $region69: #{bert_encoder_v2.1} parent=1 // pred_fallthru
      _
    // Predicated region
    $region70: #{bert_encoder_v2.1} parent=1 // pred_check
      _
    $region71: #{bert_encoder_v2.1} parent=1 // pred_check_branch
      %94 = sbr.rel (0) target = $region73
    $region72: #{bert_encoder_v2.1} parent=1 // pred_region
      _
    $region73: #{bert_encoder_v2.1} parent=1 // pred_fallthru
      _
    // Predicated region
    $region74: #{bert_encoder_v2.1} parent=1 // pred_check
      _
    $region75: #{bert_encoder_v2.1} parent=1 // pred_check_branch
      %96 = sbr.rel (0) target = $region77
    $region76: #{bert_encoder_v2.1} parent=1 // pred_region
      %98 = dma.done [#allocation3], 256
    $region77: #{bert_encoder_v2.1} parent=1 // pred_fallthru
      _
    // Predicated region
    $region78: #{bert_encoder_v2.1} parent=1 // pred_check
      _
    $region79: #{bert_encoder_v2.1} parent=1 // pred_check_branch
      %100 = sbr.rel (0) target = $region81
    $region80: #{bert_encoder_v2.1} parent=1 // pred_region
      %102 = dma.done [#allocation6], 1024
    $region81: #{bert_encoder_v2.1} parent=1 // pred_fallthru
      _
    // Predicated region
    $region82: #{bert_encoder_v2.1} parent=1 // pred_check
      _
    $region83: #{bert_encoder_v2.1} parent=1 // pred_check_branch
      %104 = sbr.rel (0) target = $region85
    $region84: #{bert_encoder_v2.1} parent=1 // pred_region
      %106 = dma.done [#allocation6], 1024
    $region85: #{bert_encoder_v2.1} parent=1 // pred_fallthru
      _
    %v107 = vld [vmem:[#allocation2] sm:$0xff]
    %v108 = vld [vmem:[#allocation2 + $0x8] sm:$0xff]
    %v109 = vld [vmem:[%s1] sm:$0x1]
    %v110 = vld [vmem:[%s1 + $0x1] sm:$0x1]
    %v113 = vperm.slane %v109, 0
    %v114 = vperm.slane %v110, 0
    %v117 = vld [vmem:[%s2] sm:$0xff]
    %v118 = vld [vmem:[%s2 + $0x8] sm:$0xff]
    %v119 = vld [vmem:[%s2 + $0x10] sm:$0xff]
    %v120 = vld [vmem:[%s2 + $0x18] sm:$0xff]
    %v121 = vld [vmem:[%s3] sm:$0x1]
    %v122 = vld [vmem:[%s4] sm:$0xff]
    %v123 = vld [vmem:[%s4 + $0x8] sm:$0xff]
    %v124 = vld [vmem:[%s4 + $0x10] sm:$0xff]
    %v125 = vld [vmem:[%s4 + $0x18] sm:$0xff]
    %v126 = vld [vmem:[%s5] sm:$0x1]
    %v127 = vld [vmem:[%s6] sm:$0xff]
    %v128 = vld [vmem:[%s6 + $0x8] sm:$0xff]
    %v129 = vld [vmem:[%s6 + $0x10] sm:$0xff]
    %v130 = vld [vmem:[%s6 + $0x18] sm:$0xff]
    %v131 = vld [vmem:[%s7] sm:$0x1]
    %v132 = vld [vmem:[#allocation5] sm:$0xff]
    %v133 = vld [vmem:[#allocation5 + $0x8] sm:$0xff]
    %v134 = vld [vmem:[#allocation5 + $0x10] sm:$0xff]
    %v135 = vld [vmem:[#allocation5 + $0x18] sm:$0xff]
    %v136 = vld [vmem:[%s9] sm:$0x1]
    %v137 = vld [vmem:[%s10] sm:$0x1]
    %v138 = vld [vmem:[%s11] sm:$0x1]
    %v139 = vld [vmem:[#allocation7] sm:$0xff]
    %v140 = vld [vmem:[#allocation7 + $0x8] sm:$0xff]
    %v141 = vld [vmem:[#allocation7 + $0x10] sm:$0xff]
    %v142 = vld [vmem:[#allocation7 + $0x18] sm:$0xff]
    %v143 = vld [vmem:[%s13] sm:$0x1]
    %v144 = vld [vmem:[%s14] sm:$0xff]
    %v145 = vld [vmem:[%s14 + $0x8] sm:$0xff]
    %v146 = vld [vmem:[%s14 + $0x10] sm:$0xff]
    %v147 = vld [vmem:[%s14 + $0x18] sm:$0xff]
    %v148 = vld [vmem:[%s14 + $0x20] sm:$0xff]
    %v149 = vld [vmem:[%s14 + $0x28] sm:$0xff]
    %v150 = vld [vmem:[%s14 + $0x30] sm:$0xff]
    %v151 = vld [vmem:[%s14 + $0x38] sm:$0xff]
    %v152 = vld [vmem:[%s15] sm:$0x1]
    %v153 = vld [vmem:[%s16] sm:$0x1]
    %v154 = vld [vmem:[%s17] sm:$0x1]
    %v156 = vperm.slane %v121, 0
    %vm158 = vcmask 261120
    %v160 = vsel %vm158, %v107, 0
    %v163 = vsel %vm158, %v108, 0
    %165 = vmatpush.msra.mxu0 0.0
    %166 = vmatpush.msra.mxu0 0.0
    %167 = vmatpush.msra.mxu0 0.0
    %168 = vmatpush.msra.mxu0 0.0
    %169 = vmatpush.msra.mxu0 0.0
    %170 = vmatpush.msra.mxu0 0.0
    %171 = vmatpush.msra.mxu0 0.0
    %172 = vmatpush.msra.mxu0 0.0
    %173 = vmatpush.msra.mxu0 0.0
    %174 = vmatpush.msra.mxu0 0.0
    %175 = vmatpush.msra.mxu0 0.0
    %176 = vmatpush.msra.mxu0 0.0
    %177 = vmatpush.msra.mxu0 %v120
    %178 = vmatpush.msra.mxu0 %v119
    %179 = vmatpush.msra.mxu0 %v118
    %180 = vmatpush.msra.mxu0 %v117
    %181 = vmatmul.f32.gmra.mxu0 %v160
    %v182 = vpop.f32.mrf.mxu0
    %v183 = vadd.f32 %v156, %v182
    %184 = vmatmul.f32.gmra.mxu0 %v163
    %v185 = vpop.f32.mrf.mxu0
    %v186 = vadd.f32 %v156, %v185
    %187 = vdwg.mxu0
    %v189 = vperm.slane %v126, 0
    %191 = vmatpush.msra.mxu0 0.0
    %192 = vmatpush.msra.mxu0 0.0
    %193 = vmatpush.msra.mxu0 0.0
    %194 = vmatpush.msra.mxu0 0.0
    %195 = vmatpush.msra.mxu0 0.0
    %196 = vmatpush.msra.mxu0 0.0
    %197 = vmatpush.msra.mxu0 0.0
    %198 = vmatpush.msra.mxu0 0.0
    %199 = vmatpush.msra.mxu0 0.0
    %200 = vmatpush.msra.mxu0 0.0
    %201 = vmatpush.msra.mxu0 0.0
    %202 = vmatpush.msra.mxu0 0.0
    %203 = vmatpush.msra.mxu0 %v125
    %204 = vmatpush.msra.mxu0 %v124
    %205 = vmatpush.msra.mxu0 %v123
    %206 = vmatpush.msra.mxu0 %v122
    %207 = vmatmul.f32.gmra.mxu0 %v160
    %v208 = vpop.f32.mrf.mxu0
    %v209 = vadd.f32 %v189, %v208
    %210 = vmatmul.f32.gmra.mxu0 %v163
    %v211 = vpop.f32.mrf.mxu0
    %v212 = vadd.f32 %v189, %v211
    %213 = vdwg.mxu0
    %v215 = vperm.slane %v131, 0
    %217 = vmatpush.msra.mxu0 0.0
    %218 = vmatpush.msra.mxu0 0.0
    %219 = vmatpush.msra.mxu0 0.0
    %220 = vmatpush.msra.mxu0 0.0
    %221 = vmatpush.msra.mxu0 0.0
    %222 = vmatpush.msra.mxu0 0.0
    %223 = vmatpush.msra.mxu0 0.0
    %224 = vmatpush.msra.mxu0 0.0
    %225 = vmatpush.msra.mxu0 0.0
    %226 = vmatpush.msra.mxu0 0.0
    %227 = vmatpush.msra.mxu0 0.0
    %228 = vmatpush.msra.mxu0 0.0
    %229 = vmatpush.msra.mxu0 %v130
    %230 = vmatpush.msra.mxu0 %v129
    %231 = vmatpush.msra.mxu0 %v128
    %232 = vmatpush.msra.mxu0 %v127
    %233 = vmatmul.f32.gmra.mxu0 %v160
    %v234 = vpop.f32.mrf.mxu0
    %v235 = vadd.f32 %v215, %v234
    %236 = vmatmul.f32.gmra.mxu0 %v163
    %v237 = vpop.f32.mrf.mxu0
    %v238 = vadd.f32 %v215, %v237
    %239 = vdwg.mxu0
    %vm240 = vcmask 64512
    %v242 = vsel %vm240, %v183, 0
    %v245 = vsel %vm240, %v209, 0
    %247 = vmatpush.xpose.msra.mxu0 0.0
    %248 = vmatpush.xpose.msra.mxu0 0.0
    %249 = vmatpush.xpose.msra.mxu0 0.0
    %250 = vmatpush.xpose.msra.mxu0 0.0
    %251 = vmatpush.xpose.msra.mxu0 0.0
    %252 = vmatpush.xpose.msra.mxu0 0.0
    %253 = vmatpush.xpose.msra.mxu0 0.0
    %254 = vmatpush.xpose.msra.mxu0 0.0
    %255 = vmatpush.xpose.msra.mxu0 0.0
    %256 = vmatpush.xpose.msra.mxu0 0.0
    %257 = vmatpush.xpose.msra.mxu0 0.0
    %258 = vmatpush.xpose.msra.mxu0 0.0
    %259 = vmatpush.xpose.msra.mxu0 0.0
    %260 = vmatpush.xpose.msra.mxu0 0.0
    %261 = vmatpush.xpose.msra.mxu0 0.0
    %262 = vmatpush.xpose.msra.mxu0 %v245
    %263 = vmatmul.f32.gmra.mxu0 %v242
    %v264 = vpop.f32.mrf.mxu0
    %v265 = vadd.f32 %v113, %v264
    %266 = vdwg.mxu0
    %v268 = vsel %vm240, %v186, 0
    %v271 = vsel %vm240, %v212, 0
    %273 = vmatpush.xpose.msra.mxu0 0.0
    %274 = vmatpush.xpose.msra.mxu0 0.0
    %275 = vmatpush.xpose.msra.mxu0 0.0
    %276 = vmatpush.xpose.msra.mxu0 0.0
    %277 = vmatpush.xpose.msra.mxu0 0.0
    %278 = vmatpush.xpose.msra.mxu0 0.0
    %279 = vmatpush.xpose.msra.mxu0 0.0
    %280 = vmatpush.xpose.msra.mxu0 0.0
    %281 = vmatpush.xpose.msra.mxu0 0.0
    %282 = vmatpush.xpose.msra.mxu0 0.0
    %283 = vmatpush.xpose.msra.mxu0 0.0
    %284 = vmatpush.xpose.msra.mxu0 0.0
    %285 = vmatpush.xpose.msra.mxu0 0.0
    %286 = vmatpush.xpose.msra.mxu0 0.0
    %287 = vmatpush.xpose.msra.mxu0 0.0
    %288 = vmatpush.xpose.msra.mxu0 %v271
    %289 = vmatmul.f32.gmra.mxu0 %v268
    %v290 = vpop.f32.mrf.mxu0
    %v291 = vadd.f32 %v114, %v290
    %292 = vdwg.mxu0
    %v293 = vsel %vm240, %v265, -inf
    %294 = vmax.xlane.f32.xlu0 %v293
    %v295 = vpop.xlane.xlu0 %294
    %v296 = vsel %vm240, %v291, -inf
    %297 = vmax.xlane.f32.xlu0 %v296
    %v298 = vpop.xlane.xlu0 %297
    %v299 = vsub.f32 %v265, %v295
    %v300 = vsub.f32 %v291, %v298
    %v301 = vmul.f32 %v299, 1.442695
    %v302 = vpow.pop %v301
    %v303 = vmul.f32 %v300, 1.442695
    %v304 = vpow.pop %v303
    %v305 = vsel %vm240, %v302, 0.0
    %306 = vadd.xlane.f32.xlu0 %v305
    %v307 = vpop.xlane.xlu0 %306
    %v308 = vsel %vm240, %v304, 0.0
    %309 = vadd.xlane.f32.xlu0 %v308
    %v310 = vpop.xlane.xlu0 %309
    %v311 = vrcp.pop %v307
    %v312 = vrcp.pop %v310
    %v313 = vmul.f32 %v302, %v311
    %v314 = vmul.f32 %v304, %v312
    %v316 = vsel %vm240, %v313, 0
    %318 = vmatpush.msra.mxu0 0.0
    %319 = vmatpush.msra.mxu0 0.0
    %320 = vmatpush.msra.mxu0 0.0
    %321 = vmatpush.msra.mxu0 0.0
    %322 = vmatpush.msra.mxu0 0.0
    %323 = vmatpush.msra.mxu0 0.0
    %324 = vmatpush.msra.mxu0 0.0
    %325 = vmatpush.msra.mxu0 0.0
    %326 = vmatpush.msra.mxu0 0.0
    %327 = vmatpush.msra.mxu0 0.0
    %328 = vmatpush.msra.mxu0 0.0
    %329 = vmatpush.msra.mxu0 0.0
    %330 = vmatpush.msra.mxu0 0.0
    %331 = vmatpush.msra.mxu0 0.0
    %332 = vmatpush.msra.mxu0 0.0
    %333 = vmatpush.msra.mxu0 %v235
    %334 = vmatmul.f32.gmra.mxu0 %v316
    %v335 = vpop.f32.mrf.mxu0
    %v336 = vadd.f32 0.0, %v335
    %337 = vdwg.mxu0
    %v339 = vsel %vm240, %v314, 0
    %341 = vmatpush.msra.mxu0 0.0
    %342 = vmatpush.msra.mxu0 0.0
    %343 = vmatpush.msra.mxu0 0.0
    %344 = vmatpush.msra.mxu0 0.0
    %345 = vmatpush.msra.mxu0 0.0
    %346 = vmatpush.msra.mxu0 0.0
    %347 = vmatpush.msra.mxu0 0.0
    %348 = vmatpush.msra.mxu0 0.0
    %349 = vmatpush.msra.mxu0 0.0
    %350 = vmatpush.msra.mxu0 0.0
    %351 = vmatpush.msra.mxu0 0.0
    %352 = vmatpush.msra.mxu0 0.0
    %353 = vmatpush.msra.mxu0 0.0
    %354 = vmatpush.msra.mxu0 0.0
    %355 = vmatpush.msra.mxu0 0.0
    %356 = vmatpush.msra.mxu0 %v238
    %357 = vmatmul.f32.gmra.mxu0 %v339
    %v358 = vpop.f32.mrf.mxu0
    %v359 = vadd.f32 0.0, %v358
    %360 = vdwg.mxu0
    %361 = vrot.lane.b32.xlu0 %v183, 120
    %v362 = vpop.permute.xlu0 %361
    %363 = vrot.lane.b32.xlu0 %v209, 120
    %v364 = vpop.permute.xlu0 %363
    %v365 = vsel %vm240, %v362, 0
    %v367 = vsel %vm240, %v364, 0
    %369 = vmatpush.xpose.msra.mxu0 0.0
    %370 = vmatpush.xpose.msra.mxu0 0.0
    %371 = vmatpush.xpose.msra.mxu0 0.0
    %372 = vmatpush.xpose.msra.mxu0 0.0
    %373 = vmatpush.xpose.msra.mxu0 0.0
    %374 = vmatpush.xpose.msra.mxu0 0.0
    %375 = vmatpush.xpose.msra.mxu0 0.0
    %376 = vmatpush.xpose.msra.mxu0 0.0
    %377 = vmatpush.xpose.msra.mxu0 0.0
    %378 = vmatpush.xpose.msra.mxu0 0.0
    %379 = vmatpush.xpose.msra.mxu0 0.0
    %380 = vmatpush.xpose.msra.mxu0 0.0
    %381 = vmatpush.xpose.msra.mxu0 0.0
    %382 = vmatpush.xpose.msra.mxu0 0.0
    %383 = vmatpush.xpose.msra.mxu0 0.0
    %384 = vmatpush.xpose.msra.mxu0 %v367
    %385 = vmatmul.f32.gmra.mxu0 %v365
    %v386 = vpop.f32.mrf.mxu0
    %v387 = vadd.f32 %v113, %v386
    %388 = vdwg.mxu0
    %389 = vrot.lane.b32.xlu0 %v186, 120
    %v390 = vpop.permute.xlu0 %389
    %391 = vrot.lane.b32.xlu0 %v212, 120
    %v392 = vpop.permute.xlu0 %391
    %v393 = vsel %vm240, %v390, 0
    %v395 = vsel %vm240, %v392, 0
    %397 = vmatpush.xpose.msra.mxu0 0.0
    %398 = vmatpush.xpose.msra.mxu0 0.0
    %399 = vmatpush.xpose.msra.mxu0 0.0
    %400 = vmatpush.xpose.msra.mxu0 0.0
    %401 = vmatpush.xpose.msra.mxu0 0.0
    %402 = vmatpush.xpose.msra.mxu0 0.0
    %403 = vmatpush.xpose.msra.mxu0 0.0
    %404 = vmatpush.xpose.msra.mxu0 0.0
    %405 = vmatpush.xpose.msra.mxu0 0.0
    %406 = vmatpush.xpose.msra.mxu0 0.0
    %407 = vmatpush.xpose.msra.mxu0 0.0
    %408 = vmatpush.xpose.msra.mxu0 0.0
    %409 = vmatpush.xpose.msra.mxu0 0.0
    %410 = vmatpush.xpose.msra.mxu0 0.0
    %411 = vmatpush.xpose.msra.mxu0 0.0
    %412 = vmatpush.xpose.msra.mxu0 %v395
    %413 = vmatmul.f32.gmra.mxu0 %v393
    %v414 = vpop.f32.mrf.mxu0
    %v415 = vadd.f32 %v114, %v414
    %416 = vdwg.mxu0
    %v417 = vsel %vm240, %v387, -inf
    %418 = vmax.xlane.f32.xlu0 %v417
    %v419 = vpop.xlane.xlu0 %418
    %v420 = vsel %vm240, %v415, -inf
    %421 = vmax.xlane.f32.xlu0 %v420
    %v422 = vpop.xlane.xlu0 %421
    %v423 = vsub.f32 %v387, %v419
    %v424 = vsub.f32 %v415, %v422
    %v425 = vmul.f32 %v423, 1.442695
    %v426 = vpow.pop %v425
    %v427 = vmul.f32 %v424, 1.442695
    %v428 = vpow.pop %v427
    %v429 = vsel %vm240, %v426, 0.0
    %430 = vadd.xlane.f32.xlu0 %v429
    %v431 = vpop.xlane.xlu0 %430
    %v432 = vsel %vm240, %v428, 0.0
    %433 = vadd.xlane.f32.xlu0 %v432
    %v434 = vpop.xlane.xlu0 %433
    %v435 = vrcp.pop %v431
    %v436 = vrcp.pop %v434
    %v437 = vmul.f32 %v426, %v435
    %v438 = vmul.f32 %v428, %v436
    %440 = vrot.lane.b32.xlu0 %v235, 120
    %v441 = vpop.permute.xlu0 %440
    %v444 = vsel %vm240, %v437, 0
    %446 = vmatpush.msra.mxu0 0.0
    %447 = vmatpush.msra.mxu0 0.0
    %448 = vmatpush.msra.mxu0 0.0
    %449 = vmatpush.msra.mxu0 0.0
    %450 = vmatpush.msra.mxu0 0.0
    %451 = vmatpush.msra.mxu0 0.0
    %452 = vmatpush.msra.mxu0 0.0
    %453 = vmatpush.msra.mxu0 0.0
    %454 = vmatpush.msra.mxu0 0.0
    %455 = vmatpush.msra.mxu0 0.0
    %456 = vmatpush.msra.mxu0 0.0
    %457 = vmatpush.msra.mxu0 0.0
    %458 = vmatpush.msra.mxu0 0.0
    %459 = vmatpush.msra.mxu0 0.0
    %460 = vmatpush.msra.mxu0 0.0
    %461 = vmatpush.msra.mxu0 %v441
    %462 = vmatmul.f32.gmra.mxu0 %v444
    %v463 = vpop.f32.mrf.mxu0
    %v464 = vadd.f32 0.0, %v463
    %465 = vdwg.mxu0
    %467 = vrot.lane.b32.xlu0 %v238, 120
    %v468 = vpop.permute.xlu0 %467
    %v471 = vsel %vm240, %v438, 0
    %473 = vmatpush.msra.mxu0 0.0
    %474 = vmatpush.msra.mxu0 0.0
    %475 = vmatpush.msra.mxu0 0.0
    %476 = vmatpush.msra.mxu0 0.0
    %477 = vmatpush.msra.mxu0 0.0
    %478 = vmatpush.msra.mxu0 0.0
    %479 = vmatpush.msra.mxu0 0.0
    %480 = vmatpush.msra.mxu0 0.0
    %481 = vmatpush.msra.mxu0 0.0
    %482 = vmatpush.msra.mxu0 0.0
    %483 = vmatpush.msra.mxu0 0.0
    %484 = vmatpush.msra.mxu0 0.0
    %485 = vmatpush.msra.mxu0 0.0
    %486 = vmatpush.msra.mxu0 0.0
    %487 = vmatpush.msra.mxu0 0.0
    %488 = vmatpush.msra.mxu0 %v468
    %489 = vmatmul.f32.gmra.mxu0 %v471
    %v490 = vpop.f32.mrf.mxu0
    %v491 = vadd.f32 0.0, %v490
    %492 = vdwg.mxu0
    %v494 = vsel %vm240, %v464, 0
    %v497 = vsel %vm240, %v491, 0
    %499 = vmatpush.msra.mxu0 0.0
    %500 = vmatpush.msra.mxu0 0.0
    %501 = vmatpush.msra.mxu0 0.0
    %502 = vmatpush.msra.mxu0 0.0
    %503 = vmatpush.msra.mxu0 0.0
    %504 = vmatpush.msra.mxu0 0.0
    %505 = vmatpush.msra.mxu0 0.0
    %506 = vmatpush.msra.mxu0 0.0
    %507 = vmatpush.msra.mxu0 0.0
    %508 = vmatpush.msra.mxu0 0.0
    %509 = vmatpush.msra.mxu0 0.0
    %510 = vmatpush.msra.mxu0 0.0
    %511 = vmatpush.msra.mxu0 0.0
    %512 = vmatpush.msra.mxu0 0.0
    %513 = vmatpush.msra.mxu0 0.0
    %514 = vmatpush.msra.mxu0 %v133
    %515 = vmatmul.f32.gmra.mxu0 %v494
    %v516 = vpop.f32.mrf.mxu0
    %v517 = vadd.f32 0.0, %v516
    %518 = vmatmul.f32.gmra.mxu0 %v497
    %v519 = vpop.f32.mrf.mxu0
    %v520 = vadd.f32 0.0, %v519
    %521 = vdwg.mxu0
    %v523 = vsel %vm240, %v336, 0
    %v526 = vsel %vm240, %v359, 0
    %528 = vmatpush.msra.mxu0 0.0
    %529 = vmatpush.msra.mxu0 0.0
    %530 = vmatpush.msra.mxu0 0.0
    %531 = vmatpush.msra.mxu0 0.0
    %532 = vmatpush.msra.mxu0 0.0
    %533 = vmatpush.msra.mxu0 0.0
    %534 = vmatpush.msra.mxu0 0.0
    %535 = vmatpush.msra.mxu0 0.0
    %536 = vmatpush.msra.mxu0 0.0
    %537 = vmatpush.msra.mxu0 0.0
    %538 = vmatpush.msra.mxu0 0.0
    %539 = vmatpush.msra.mxu0 0.0
    %540 = vmatpush.msra.mxu0 0.0
    %541 = vmatpush.msra.mxu0 0.0
    %542 = vmatpush.msra.mxu0 0.0
    %543 = vmatpush.msra.mxu0 %v132
    %544 = vmatmul.f32.gmra.mxu0 %v523
    %v545 = vpop.f32.mrf.mxu0
    %v546 = vadd.f32 %v517, %v545
    %547 = vmatmul.f32.gmra.mxu0 %v526
    %v548 = vpop.f32.mrf.mxu0
    %v549 = vadd.f32 %v520, %v548
    %550 = vdwg.mxu0
    %551 = vrot.lane.b32.xlu0 %v183, 112
    %v552 = vpop.permute.xlu0 %551
    %553 = vrot.lane.b32.xlu0 %v209, 112
    %v554 = vpop.permute.xlu0 %553
    %v555 = vsel %vm240, %v552, 0
    %v557 = vsel %vm240, %v554, 0
    %559 = vmatpush.xpose.msra.mxu0 0.0
    %560 = vmatpush.xpose.msra.mxu0 0.0
    %561 = vmatpush.xpose.msra.mxu0 0.0
    %562 = vmatpush.xpose.msra.mxu0 0.0
    %563 = vmatpush.xpose.msra.mxu0 0.0
    %564 = vmatpush.xpose.msra.mxu0 0.0
    %565 = vmatpush.xpose.msra.mxu0 0.0
    %566 = vmatpush.xpose.msra.mxu0 0.0
    %567 = vmatpush.xpose.msra.mxu0 0.0
    %568 = vmatpush.xpose.msra.mxu0 0.0
    %569 = vmatpush.xpose.msra.mxu0 0.0
    %570 = vmatpush.xpose.msra.mxu0 0.0
    %571 = vmatpush.xpose.msra.mxu0 0.0
    %572 = vmatpush.xpose.msra.mxu0 0.0
    %573 = vmatpush.xpose.msra.mxu0 0.0
    %574 = vmatpush.xpose.msra.mxu0 %v557
    %575 = vmatmul.f32.gmra.mxu0 %v555
    %v576 = vpop.f32.mrf.mxu0
    %v577 = vadd.f32 %v113, %v576
    %578 = vdwg.mxu0
    %579 = vrot.lane.b32.xlu0 %v186, 112
    %v580 = vpop.permute.xlu0 %579
    %581 = vrot.lane.b32.xlu0 %v212, 112
    %v582 = vpop.permute.xlu0 %581
    %v583 = vsel %vm240, %v580, 0
    %v585 = vsel %vm240, %v582, 0
    %587 = vmatpush.xpose.msra.mxu0 0.0
    %588 = vmatpush.xpose.msra.mxu0 0.0
    %589 = vmatpush.xpose.msra.mxu0 0.0
    %590 = vmatpush.xpose.msra.mxu0 0.0
    %591 = vmatpush.xpose.msra.mxu0 0.0
    %592 = vmatpush.xpose.msra.mxu0 0.0
    %593 = vmatpush.xpose.msra.mxu0 0.0
    %594 = vmatpush.xpose.msra.mxu0 0.0
    %595 = vmatpush.xpose.msra.mxu0 0.0
    %596 = vmatpush.xpose.msra.mxu0 0.0
    %597 = vmatpush.xpose.msra.mxu0 0.0
    %598 = vmatpush.xpose.msra.mxu0 0.0
    %599 = vmatpush.xpose.msra.mxu0 0.0
    %600 = vmatpush.xpose.msra.mxu0 0.0
    %601 = vmatpush.xpose.msra.mxu0 0.0
    %602 = vmatpush.xpose.msra.mxu0 %v585
    %603 = vmatmul.f32.gmra.mxu0 %v583
    %v604 = vpop.f32.mrf.mxu0
    %v605 = vadd.f32 %v114, %v604
    %606 = vdwg.mxu0
    %v607 = vsel %vm240, %v577, -inf
    %608 = vmax.xlane.f32.xlu0 %v607
    %v609 = vpop.xlane.xlu0 %608
    %v610 = vsel %vm240, %v605, -inf
    %611 = vmax.xlane.f32.xlu0 %v610
    %v612 = vpop.xlane.xlu0 %611
    %v613 = vsub.f32 %v577, %v609
    %v614 = vsub.f32 %v605, %v612
    %v615 = vmul.f32 %v613, 1.442695
    %v616 = vpow.pop %v615
    %v617 = vmul.f32 %v614, 1.442695
    %v618 = vpow.pop %v617
    %v619 = vsel %vm240, %v616, 0.0
    %620 = vadd.xlane.f32.xlu0 %v619
    %v621 = vpop.xlane.xlu0 %620
    %v622 = vsel %vm240, %v618, 0.0
    %623 = vadd.xlane.f32.xlu0 %v622
    %v624 = vpop.xlane.xlu0 %623
    %v625 = vrcp.pop %v621
    %v626 = vrcp.pop %v624
    %v627 = vmul.f32 %v616, %v625
    %v628 = vmul.f32 %v618, %v626
    %629 = vrot.lane.b32.xlu0 %v235, 112
    %v630 = vpop.permute.xlu0 %629
    %v633 = vsel %vm240, %v627, 0
    %635 = vmatpush.msra.mxu0 0.0
    %636 = vmatpush.msra.mxu0 0.0
    %637 = vmatpush.msra.mxu0 0.0
    %638 = vmatpush.msra.mxu0 0.0
    %639 = vmatpush.msra.mxu0 0.0
    %640 = vmatpush.msra.mxu0 0.0
    %641 = vmatpush.msra.mxu0 0.0
    %642 = vmatpush.msra.mxu0 0.0
    %643 = vmatpush.msra.mxu0 0.0
    %644 = vmatpush.msra.mxu0 0.0
    %645 = vmatpush.msra.mxu0 0.0
    %646 = vmatpush.msra.mxu0 0.0
    %647 = vmatpush.msra.mxu0 0.0
    %648 = vmatpush.msra.mxu0 0.0
    %649 = vmatpush.msra.mxu0 0.0
    %650 = vmatpush.msra.mxu0 %v630
    %651 = vmatmul.f32.gmra.mxu0 %v633
    %v652 = vpop.f32.mrf.mxu0
    %v653 = vadd.f32 0.0, %v652
    %654 = vdwg.mxu0
    %655 = vrot.lane.b32.xlu0 %v238, 112
    %v656 = vpop.permute.xlu0 %655
    %v659 = vsel %vm240, %v628, 0
    %661 = vmatpush.msra.mxu0 0.0
    %662 = vmatpush.msra.mxu0 0.0
    %663 = vmatpush.msra.mxu0 0.0
    %664 = vmatpush.msra.mxu0 0.0
    %665 = vmatpush.msra.mxu0 0.0
    %666 = vmatpush.msra.mxu0 0.0
    %667 = vmatpush.msra.mxu0 0.0
    %668 = vmatpush.msra.mxu0 0.0
    %669 = vmatpush.msra.mxu0 0.0
    %670 = vmatpush.msra.mxu0 0.0
    %671 = vmatpush.msra.mxu0 0.0
    %672 = vmatpush.msra.mxu0 0.0
    %673 = vmatpush.msra.mxu0 0.0
    %674 = vmatpush.msra.mxu0 0.0
    %675 = vmatpush.msra.mxu0 0.0
    %676 = vmatpush.msra.mxu0 %v656
    %677 = vmatmul.f32.gmra.mxu0 %v659
    %v678 = vpop.f32.mrf.mxu0
    %v679 = vadd.f32 0.0, %v678
    %680 = vdwg.mxu0
    %v682 = vsel %vm240, %v653, 0
    %v685 = vsel %vm240, %v679, 0
    %687 = vmatpush.msra.mxu0 0.0
    %688 = vmatpush.msra.mxu0 0.0
    %689 = vmatpush.msra.mxu0 0.0
    %690 = vmatpush.msra.mxu0 0.0
    %691 = vmatpush.msra.mxu0 0.0
    %692 = vmatpush.msra.mxu0 0.0
    %693 = vmatpush.msra.mxu0 0.0
    %694 = vmatpush.msra.mxu0 0.0
    %695 = vmatpush.msra.mxu0 0.0
    %696 = vmatpush.msra.mxu0 0.0
    %697 = vmatpush.msra.mxu0 0.0
    %698 = vmatpush.msra.mxu0 0.0
    %699 = vmatpush.msra.mxu0 0.0
    %700 = vmatpush.msra.mxu0 0.0
    %701 = vmatpush.msra.mxu0 0.0
    %702 = vmatpush.msra.mxu0 %v134
    %703 = vmatmul.f32.gmra.mxu0 %v682
    %v704 = vpop.f32.mrf.mxu0
    %v705 = vadd.f32 0.0, %v704
    %706 = vmatmul.f32.gmra.mxu0 %v685
    %v707 = vpop.f32.mrf.mxu0
    %v708 = vadd.f32 0.0, %v707
    %709 = vdwg.mxu0
    %v710 = vadd.f32 %v546, %v705
    %v711 = vadd.f32 %v549, %v708
    %712 = vrot.lane.b32.xlu0 %v183, 104
    %v713 = vpop.permute.xlu0 %712
    %714 = vrot.lane.b32.xlu0 %v209, 104
    %v715 = vpop.permute.xlu0 %714
    %v716 = vsel %vm240, %v713, 0
    %v718 = vsel %vm240, %v715, 0
    %720 = vmatpush.xpose.msra.mxu0 0.0
    %721 = vmatpush.xpose.msra.mxu0 0.0
    %722 = vmatpush.xpose.msra.mxu0 0.0
    %723 = vmatpush.xpose.msra.mxu0 0.0
    %724 = vmatpush.xpose.msra.mxu0 0.0
    %725 = vmatpush.xpose.msra.mxu0 0.0
    %726 = vmatpush.xpose.msra.mxu0 0.0
    %727 = vmatpush.xpose.msra.mxu0 0.0
    %728 = vmatpush.xpose.msra.mxu0 0.0
    %729 = vmatpush.xpose.msra.mxu0 0.0
    %730 = vmatpush.xpose.msra.mxu0 0.0
    %731 = vmatpush.xpose.msra.mxu0 0.0
    %732 = vmatpush.xpose.msra.mxu0 0.0
    %733 = vmatpush.xpose.msra.mxu0 0.0
    %734 = vmatpush.xpose.msra.mxu0 0.0
    %735 = vmatpush.xpose.msra.mxu0 %v718
    %736 = vmatmul.f32.gmra.mxu0 %v716
    %v737 = vpop.f32.mrf.mxu0
    %v738 = vadd.f32 %v113, %v737
    %739 = vdwg.mxu0
    %740 = vrot.lane.b32.xlu0 %v186, 104
    %v741 = vpop.permute.xlu0 %740
    %742 = vrot.lane.b32.xlu0 %v212, 104
    %v743 = vpop.permute.xlu0 %742
    %v744 = vsel %vm240, %v741, 0
    %v746 = vsel %vm240, %v743, 0
    %748 = vmatpush.xpose.msra.mxu0 0.0
    %749 = vmatpush.xpose.msra.mxu0 0.0
    %750 = vmatpush.xpose.msra.mxu0 0.0
    %751 = vmatpush.xpose.msra.mxu0 0.0
    %752 = vmatpush.xpose.msra.mxu0 0.0
    %753 = vmatpush.xpose.msra.mxu0 0.0
    %754 = vmatpush.xpose.msra.mxu0 0.0
    %755 = vmatpush.xpose.msra.mxu0 0.0
    %756 = vmatpush.xpose.msra.mxu0 0.0
    %757 = vmatpush.xpose.msra.mxu0 0.0
    %758 = vmatpush.xpose.msra.mxu0 0.0
    %759 = vmatpush.xpose.msra.mxu0 0.0
    %760 = vmatpush.xpose.msra.mxu0 0.0
    %761 = vmatpush.xpose.msra.mxu0 0.0
    %762 = vmatpush.xpose.msra.mxu0 0.0
    %763 = vmatpush.xpose.msra.mxu0 %v746
    %764 = vmatmul.f32.gmra.mxu0 %v744
    %v765 = vpop.f32.mrf.mxu0
    %v766 = vadd.f32 %v114, %v765
    %767 = vdwg.mxu0
    %v768 = vsel %vm240, %v738, -inf
    %769 = vmax.xlane.f32.xlu0 %v768
    %v770 = vpop.xlane.xlu0 %769
    %v771 = vsel %vm240, %v766, -inf
    %772 = vmax.xlane.f32.xlu0 %v771
    %v773 = vpop.xlane.xlu0 %772
    %v774 = vsub.f32 %v738, %v770
    %v775 = vsub.f32 %v766, %v773
    %v776 = vmul.f32 %v774, 1.442695
    %v777 = vpow.pop %v776
    %v778 = vmul.f32 %v775, 1.442695
    %v779 = vpow.pop %v778
    %v780 = vsel %vm240, %v777, 0.0
    %781 = vadd.xlane.f32.xlu0 %v780
    %v782 = vpop.xlane.xlu0 %781
    %v783 = vsel %vm240, %v779, 0.0
    %784 = vadd.xlane.f32.xlu0 %v783
    %v785 = vpop.xlane.xlu0 %784
    %v786 = vrcp.pop %v782
    %v787 = vrcp.pop %v785
    %v788 = vmul.f32 %v777, %v786
    %v789 = vmul.f32 %v779, %v787
    %790 = vrot.lane.b32.xlu0 %v235, 104
    %v791 = vpop.permute.xlu0 %790
    %v794 = vsel %vm240, %v788, 0
    %796 = vmatpush.msra.mxu0 0.0
    %797 = vmatpush.msra.mxu0 0.0
    %798 = vmatpush.msra.mxu0 0.0
    %799 = vmatpush.msra.mxu0 0.0
    %800 = vmatpush.msra.mxu0 0.0
    %801 = vmatpush.msra.mxu0 0.0
    %802 = vmatpush.msra.mxu0 0.0
    %803 = vmatpush.msra.mxu0 0.0
    %804 = vmatpush.msra.mxu0 0.0
    %805 = vmatpush.msra.mxu0 0.0
    %806 = vmatpush.msra.mxu0 0.0
    %807 = vmatpush.msra.mxu0 0.0
    %808 = vmatpush.msra.mxu0 0.0
    %809 = vmatpush.msra.mxu0 0.0
    %810 = vmatpush.msra.mxu0 0.0
    %811 = vmatpush.msra.mxu0 %v791
    %812 = vmatmul.f32.gmra.mxu0 %v794
    %v813 = vpop.f32.mrf.mxu0
    %v814 = vadd.f32 0.0, %v813
    %815 = vdwg.mxu0
    %816 = vrot.lane.b32.xlu0 %v238, 104
    %v817 = vpop.permute.xlu0 %816
    %v820 = vsel %vm240, %v789, 0
    %822 = vmatpush.msra.mxu0 0.0
    %823 = vmatpush.msra.mxu0 0.0
    %824 = vmatpush.msra.mxu0 0.0
    %825 = vmatpush.msra.mxu0 0.0
    %826 = vmatpush.msra.mxu0 0.0
    %827 = vmatpush.msra.mxu0 0.0
    %828 = vmatpush.msra.mxu0 0.0
    %829 = vmatpush.msra.mxu0 0.0
    %830 = vmatpush.msra.mxu0 0.0
    %831 = vmatpush.msra.mxu0 0.0
    %832 = vmatpush.msra.mxu0 0.0
    %833 = vmatpush.msra.mxu0 0.0
    %834 = vmatpush.msra.mxu0 0.0
    %835 = vmatpush.msra.mxu0 0.0
    %836 = vmatpush.msra.mxu0 0.0
    %837 = vmatpush.msra.mxu0 %v817
    %838 = vmatmul.f32.gmra.mxu0 %v820
    %v839 = vpop.f32.mrf.mxu0
    %v840 = vadd.f32 0.0, %v839
    %841 = vdwg.mxu0
    %v843 = vsel %vm240, %v814, 0
    %v846 = vsel %vm240, %v840, 0
    %848 = vmatpush.msra.mxu0 0.0
    %849 = vmatpush.msra.mxu0 0.0
    %850 = vmatpush.msra.mxu0 0.0
    %851 = vmatpush.msra.mxu0 0.0
    %852 = vmatpush.msra.mxu0 0.0
    %853 = vmatpush.msra.mxu0 0.0
    %854 = vmatpush.msra.mxu0 0.0
    %855 = vmatpush.msra.mxu0 0.0
    %856 = vmatpush.msra.mxu0 0.0
    %857 = vmatpush.msra.mxu0 0.0
    %858 = vmatpush.msra.mxu0 0.0
    %859 = vmatpush.msra.mxu0 0.0
    %860 = vmatpush.msra.mxu0 0.0
    %861 = vmatpush.msra.mxu0 0.0
    %862 = vmatpush.msra.mxu0 0.0
    %863 = vmatpush.msra.mxu0 %v135
    %864 = vmatmul.f32.gmra.mxu0 %v843
    %v865 = vpop.f32.mrf.mxu0
    %v866 = vadd.f32 0.0, %v865
    %867 = vmatmul.f32.gmra.mxu0 %v846
    %v868 = vpop.f32.mrf.mxu0
    %v869 = vadd.f32 0.0, %v868
    %870 = vdwg.mxu0
    %v871 = vadd.f32 %v710, %v866
    %v872 = vadd.f32 %v711, %v869
    %v874 = vperm.slane %v136, 0
    %v876 = vadd.f32 %v871, %v874
    %v877 = vadd.f32 %v872, %v874
    %v878 = vadd.f32 %v107, %v876
    %v879 = vadd.f32 %v108, %v877
    %v880 = vsel %vm158, %v878, 0.0
    %881 = vadd.xlane.f32.xlu0 %v880
    %v882 = vpop.xlane.xlu0 %881
    %v883 = vsel %vm158, %v879, 0.0
    %884 = vadd.xlane.f32.xlu0 %v883
    %v885 = vpop.xlane.xlu0 %884
    %v886 = vrcp.pop 32.0
    %v887 = vmul.f32 32.0, %v886
    %v888 = vsub.f32 1.0, %v887
    %v889 = vmul.f32 %v886, %v888
    %v890 = vadd.f32 %v886, %v889
    %vm891 = vweird.f32 %v886
    %v892 = vsel %vm891, %v886, %v890
    %v893 = vmul.f32 %v882, %v892
    %v894 = vmul.f32 %v885, %v892
    %v895 = vsub.f32 %v878, %v893
    %v896 = vsub.f32 %v879, %v894
    %v897 = vmul.f32 %v895, %v895
    %v898 = vmul.f32 %v896, %v896
    %v899 = vsel %vm158, %v897, 0.0
    %900 = vadd.xlane.f32.xlu0 %v899
    %v901 = vpop.xlane.xlu0 %900
    %v902 = vsel %vm158, %v898, 0.0
    %903 = vadd.xlane.f32.xlu0 %v902
    %v904 = vpop.xlane.xlu0 %903
    %v905 = vmul.f32 %v901, %v892
    %v906 = vmul.f32 %v904, %v892
    %v907 = vadd.f32 %v905, 1e-05
    %v908 = vadd.f32 %v906, 1e-05
    %v909 = vrsqrt.pop %v907
    %v910 = vmul.f32 %v909, %v907
    %v911 = vmul.f32 %v910, %v909
    %v912 = vmul.f32 0.5, %v911
    %v913 = vsub.f32 1.5, %v912
    %v914 = vmul.f32 %v909, %v913
    %vm915 = vweird.f32 %v907
    %vm916 = vweird.f32 %v909
    %vm917 = vmor %vm915, %vm916
    %v918 = vsel %vm917, %v909, %v914
    %v919 = vrsqrt.pop %v908
    %v920 = vmul.f32 %v919, %v908
    %v921 = vmul.f32 %v920, %v919
    %v922 = vmul.f32 0.5, %v921
    %v923 = vsub.f32 1.5, %v922
    %v924 = vmul.f32 %v919, %v923
    %vm925 = vweird.f32 %v908
    %vm926 = vweird.f32 %v919
    %vm927 = vmor %vm925, %vm926
    %v928 = vsel %vm927, %v919, %v924
    %v929 = vmul.f32 %v895, %v918
    %v930 = vmul.f32 %v896, %v928
    %v932 = vperm.slane %v137, 0
    %v934 = vmul.f32 %v929, %v932
    %v935 = vmul.f32 %v930, %v932
    %v937 = vperm.slane %v138, 0
    %v939 = vadd.f32 %v934, %v937
    %v940 = vadd.f32 %v935, %v937
    %v942 = vperm.slane %v143, 0
    %v945 = vsel %vm158, %v939, 0
    %v948 = vsel %vm158, %v940, 0
    %950 = vmatpush.msra.mxu0 0.0
    %951 = vmatpush.msra.mxu0 0.0
    %952 = vmatpush.msra.mxu0 0.0
    %953 = vmatpush.msra.mxu0 0.0
    %954 = vmatpush.msra.mxu0 0.0
    %955 = vmatpush.msra.mxu0 0.0
    %956 = vmatpush.msra.mxu0 0.0
    %957 = vmatpush.msra.mxu0 0.0
    %958 = vmatpush.msra.mxu0 0.0
    %959 = vmatpush.msra.mxu0 0.0
    %960 = vmatpush.msra.mxu0 0.0
    %961 = vmatpush.msra.mxu0 0.0
    %962 = vmatpush.msra.mxu0 %v142
    %963 = vmatpush.msra.mxu0 %v141
    %964 = vmatpush.msra.mxu0 %v140
    %965 = vmatpush.msra.mxu0 %v139
    %966 = vmatmul.f32.gmra.mxu0 %v945
    %v967 = vpop.f32.mrf.mxu0
    %v968 = vadd.f32 %v942, %v967
    %969 = vmatmul.f32.gmra.mxu0 %v948
    %v970 = vpop.f32.mrf.mxu0
    %v971 = vadd.f32 %v942, %v970
    %972 = vdwg.mxu0
    %v973 = vmax.f32 %v968, 0.0
    %v974 = vmax.f32 %v971, 0.0
    %v976 = vperm.slane %v152, 0
    %vm978 = vcmask 523264
    %v980 = vsel %vm978, %v973, 0
    %v983 = vsel %vm978, %v974, 0
    %985 = vmatpush.msra.mxu0 0.0
    %986 = vmatpush.msra.mxu0 0.0
    %987 = vmatpush.msra.mxu0 0.0
    %988 = vmatpush.msra.mxu0 0.0
    %989 = vmatpush.msra.mxu0 0.0
    %990 = vmatpush.msra.mxu0 0.0
    %991 = vmatpush.msra.mxu0 0.0
    %992 = vmatpush.msra.mxu0 0.0
    %993 = vmatpush.msra.mxu0 %v151
    %994 = vmatpush.msra.mxu0 %v150
    %995 = vmatpush.msra.mxu0 %v149
    %996 = vmatpush.msra.mxu0 %v148
    %997 = vmatpush.msra.mxu0 %v147
    %998 = vmatpush.msra.mxu0 %v146
    %999 = vmatpush.msra.mxu0 %v145
    %1000 = vmatpush.msra.mxu0 %v144
    %1001 = vmatmul.f32.gmra.mxu0 %v980
    %v1002 = vpop.f32.mrf.mxu0
    %v1003 = vadd.f32 %v976, %v1002
    %1004 = vmatmul.f32.gmra.mxu0 %v983
    %v1005 = vpop.f32.mrf.mxu0
    %v1006 = vadd.f32 %v976, %v1005
    %1007 = vdwg.mxu0
    %v1008 = vadd.f32 %v939, %v1003
    %v1009 = vadd.f32 %v940, %v1006
    %v1010 = vsel %vm158, %v1008, 0.0
    %1011 = vadd.xlane.f32.xlu0 %v1010
    %v1012 = vpop.xlane.xlu0 %1011
    %v1013 = vsel %vm158, %v1009, 0.0
    %1014 = vadd.xlane.f32.xlu0 %v1013
    %v1015 = vpop.xlane.xlu0 %1014
    %v1016 = vmul.f32 %v1012, %v892
    %v1017 = vmul.f32 %v1015, %v892
    %v1018 = vsub.f32 %v1008, %v1016
    %v1019 = vsub.f32 %v1009, %v1017
    %v1020 = vmul.f32 %v1018, %v1018
    %v1021 = vmul.f32 %v1019, %v1019
    %v1022 = vsel %vm158, %v1020, 0.0
    %1023 = vadd.xlane.f32.xlu0 %v1022
    %v1024 = vpop.xlane.xlu0 %1023
    %v1025 = vsel %vm158, %v1021, 0.0
    %1026 = vadd.xlane.f32.xlu0 %v1025
    %v1027 = vpop.xlane.xlu0 %1026
    %v1028 = vmul.f32 %v1024, %v892
    %v1029 = vmul.f32 %v1027, %v892
    %v1030 = vadd.f32 %v1028, 1e-05
    %v1031 = vadd.f32 %v1029, 1e-05
    %v1032 = vrsqrt.pop %v1030
    %v1033 = vmul.f32 %v1032, %v1030
    %v1034 = vmul.f32 %v1033, %v1032
    %v1035 = vmul.f32 0.5, %v1034
    %v1036 = vsub.f32 1.5, %v1035
    %v1037 = vmul.f32 %v1032, %v1036
    %vm1038 = vweird.f32 %v1030
    %vm1039 = vweird.f32 %v1032
    %vm1040 = vmor %vm1038, %vm1039
    %v1041 = vsel %vm1040, %v1032, %v1037
    %v1042 = vrsqrt.pop %v1031
    %v1043 = vmul.f32 %v1042, %v1031
    %v1044 = vmul.f32 %v1043, %v1042
    %v1045 = vmul.f32 0.5, %v1044
    %v1046 = vsub.f32 1.5, %v1045
    %v1047 = vmul.f32 %v1042, %v1046
    %vm1048 = vweird.f32 %v1031
    %vm1049 = vweird.f32 %v1042
    %vm1050 = vmor %vm1048, %vm1049
    %v1051 = vsel %vm1050, %v1042, %v1047
    %v1052 = vmul.f32 %v1018, %v1041
    %v1053 = vmul.f32 %v1019, %v1051
    %v1055 = vperm.slane %v153, 0
    %v1057 = vmul.f32 %v1052, %v1055
    %v1058 = vmul.f32 %v1053, %v1055
    %v1060 = vperm.slane %v154, 0
    %v1062 = vadd.f32 %v1057, %v1060
    %v1063 = vadd.f32 %v1058, %v1060
    %s1064 = scalar_lea.vmem %s2, 32
    %v1065 = vld [vmem:[%s1064] sm:$0xff]
    %v1066 = vld [vmem:[%s1064 + $0x8] sm:$0xff]
    %v1067 = vld [vmem:[%s1064 + $0x10] sm:$0xff]
    %v1068 = vld [vmem:[%s1064 + $0x18] sm:$0xff]
    %s1069 = scalar_lea.vmem %s3, 1
    %v1070 = vld [vmem:[%s1069] sm:$0x1]
    %s1071 = scalar_lea.vmem %s4, 32
    %v1072 = vld [vmem:[%s1071] sm:$0xff]
    %v1073 = vld [vmem:[%s1071 + $0x8] sm:$0xff]
    %v1074 = vld [vmem:[%s1071 + $0x10] sm:$0xff]
    %v1075 = vld [vmem:[%s1071 + $0x18] sm:$0xff]
    %s1076 = scalar_lea.vmem %s5, 1
    %v1077 = vld [vmem:[%s1076] sm:$0x1]
    %s1078 = scalar_lea.vmem %s6, 32
    %v1079 = vld [vmem:[%s1078] sm:$0xff]
    %v1080 = vld [vmem:[%s1078 + $0x8] sm:$0xff]
    %v1081 = vld [vmem:[%s1078 + $0x10] sm:$0xff]
    %v1082 = vld [vmem:[%s1078 + $0x18] sm:$0xff]
    %s1083 = scalar_lea.vmem %s7, 1
    %v1084 = vld [vmem:[%s1083] sm:$0x1]
    %s1085 = scalar_lea.vmem [#allocation5], 32
    %v1086 = vld [vmem:[%s1085] sm:$0xff]
    %v1087 = vld [vmem:[%s1085 + $0x8] sm:$0xff]
    %v1088 = vld [vmem:[%s1085 + $0x10] sm:$0xff]
    %v1089 = vld [vmem:[%s1085 + $0x18] sm:$0xff]
    %s1090 = scalar_lea.vmem %s9, 1
    %v1091 = vld [vmem:[%s1090] sm:$0x1]
    %s1092 = scalar_lea.vmem %s10, 1
    %v1093 = vld [vmem:[%s1092] sm:$0x1]
    %s1094 = scalar_lea.vmem %s11, 1
    %v1095 = vld [vmem:[%s1094] sm:$0x1]
    %s1096 = scalar_lea.vmem [#allocation7], 32
    %v1097 = vld [vmem:[%s1096] sm:$0xff]
    %v1098 = vld [vmem:[%s1096 + $0x8] sm:$0xff]
    %v1099 = vld [vmem:[%s1096 + $0x10] sm:$0xff]
    %v1100 = vld [vmem:[%s1096 + $0x18] sm:$0xff]
    %s1101 = scalar_lea.vmem %s13, 1
    %v1102 = vld [vmem:[%s1101] sm:$0x1]
    %s1103 = scalar_lea.vmem %s14, 64
    %v1104 = vld [vmem:[%s1103] sm:$0xff]
    %v1105 = vld [vmem:[%s1103 + $0x8] sm:$0xff]
    %v1106 = vld [vmem:[%s1103 + $0x10] sm:$0xff]
    %v1107 = vld [vmem:[%s1103 + $0x18] sm:$0xff]
    %v1108 = vld [vmem:[%s1103 + $0x20] sm:$0xff]
    %v1109 = vld [vmem:[%s1103 + $0x28] sm:$0xff]
    %v1110 = vld [vmem:[%s1103 + $0x30] sm:$0xff]
    %v1111 = vld [vmem:[%s1103 + $0x38] sm:$0xff]
    %s1112 = scalar_lea.vmem %s15, 1
    %v1113 = vld [vmem:[%s1112] sm:$0x1]
    %s1114 = scalar_lea.vmem %s16, 1
    %v1115 = vld [vmem:[%s1114] sm:$0x1]
    %s1116 = scalar_lea.vmem %s17, 1
    %v1117 = vld [vmem:[%s1116] sm:$0x1]
    %v1119 = vperm.slane %v1070, 0
    %v1122 = vsel %vm158, %v1062, 0
    %v1125 = vsel %vm158, %v1063, 0
    %1127 = vmatpush.msra.mxu0 0.0
    %1128 = vmatpush.msra.mxu0 0.0
    %1129 = vmatpush.msra.mxu0 0.0
    %1130 = vmatpush.msra.mxu0 0.0
    %1131 = vmatpush.msra.mxu0 0.0
    %1132 = vmatpush.msra.mxu0 0.0
    %1133 = vmatpush.msra.mxu0 0.0
    %1134 = vmatpush.msra.mxu0 0.0
    %1135 = vmatpush.msra.mxu0 0.0
    %1136 = vmatpush.msra.mxu0 0.0
    %1137 = vmatpush.msra.mxu0 0.0
    %1138 = vmatpush.msra.mxu0 0.0
    %1139 = vmatpush.msra.mxu0 %v1068
    %1140 = vmatpush.msra.mxu0 %v1067
    %1141 = vmatpush.msra.mxu0 %v1066
    %1142 = vmatpush.msra.mxu0 %v1065
    %1143 = vmatmul.f32.gmra.mxu0 %v1122
    %v1144 = vpop.f32.mrf.mxu0
    %v1145 = vadd.f32 %v1119, %v1144
    %1146 = vmatmul.f32.gmra.mxu0 %v1125
    %v1147 = vpop.f32.mrf.mxu0
    %v1148 = vadd.f32 %v1119, %v1147
    %1149 = vdwg.mxu0
    %v1151 = vperm.slane %v1077, 0
    %1153 = vmatpush.msra.mxu0 0.0
    %1154 = vmatpush.msra.mxu0 0.0
    %1155 = vmatpush.msra.mxu0 0.0
    %1156 = vmatpush.msra.mxu0 0.0
    %1157 = vmatpush.msra.mxu0 0.0
    %1158 = vmatpush.msra.mxu0 0.0
    %1159 = vmatpush.msra.mxu0 0.0
    %1160 = vmatpush.msra.mxu0 0.0
    %1161 = vmatpush.msra.mxu0 0.0
    %1162 = vmatpush.msra.mxu0 0.0
    %1163 = vmatpush.msra.mxu0 0.0
    %1164 = vmatpush.msra.mxu0 0.0
    %1165 = vmatpush.msra.mxu0 %v1075
    %1166 = vmatpush.msra.mxu0 %v1074
    %1167 = vmatpush.msra.mxu0 %v1073
    %1168 = vmatpush.msra.mxu0 %v1072
    %1169 = vmatmul.f32.gmra.mxu0 %v1122
    %v1170 = vpop.f32.mrf.mxu0
    %v1171 = vadd.f32 %v1151, %v1170
    %1172 = vmatmul.f32.gmra.mxu0 %v1125
    %v1173 = vpop.f32.mrf.mxu0
    %v1174 = vadd.f32 %v1151, %v1173
    %1175 = vdwg.mxu0
    %v1177 = vperm.slane %v1084, 0
    %1179 = vmatpush.msra.mxu0 0.0
    %1180 = vmatpush.msra.mxu0 0.0
    %1181 = vmatpush.msra.mxu0 0.0
    %1182 = vmatpush.msra.mxu0 0.0
    %1183 = vmatpush.msra.mxu0 0.0
    %1184 = vmatpush.msra.mxu0 0.0
    %1185 = vmatpush.msra.mxu0 0.0
    %1186 = vmatpush.msra.mxu0 0.0
    %1187 = vmatpush.msra.mxu0 0.0
    %1188 = vmatpush.msra.mxu0 0.0
    %1189 = vmatpush.msra.mxu0 0.0
    %1190 = vmatpush.msra.mxu0 0.0
    %1191 = vmatpush.msra.mxu0 %v1082
    %1192 = vmatpush.msra.mxu0 %v1081
    %1193 = vmatpush.msra.mxu0 %v1080
    %1194 = vmatpush.msra.mxu0 %v1079
    %1195 = vmatmul.f32.gmra.mxu0 %v1122
    %v1196 = vpop.f32.mrf.mxu0
    %v1197 = vadd.f32 %v1177, %v1196
    %1198 = vmatmul.f32.gmra.mxu0 %v1125
    %v1199 = vpop.f32.mrf.mxu0
    %v1200 = vadd.f32 %v1177, %v1199
    %1201 = vdwg.mxu0
    %v1203 = vsel %vm240, %v1145, 0
    %v1206 = vsel %vm240, %v1171, 0
    %1208 = vmatpush.xpose.msra.mxu0 0.0
    %1209 = vmatpush.xpose.msra.mxu0 0.0
    %1210 = vmatpush.xpose.msra.mxu0 0.0
    %1211 = vmatpush.xpose.msra.mxu0 0.0
    %1212 = vmatpush.xpose.msra.mxu0 0.0
    %1213 = vmatpush.xpose.msra.mxu0 0.0
    %1214 = vmatpush.xpose.msra.mxu0 0.0
    %1215 = vmatpush.xpose.msra.mxu0 0.0
    %1216 = vmatpush.xpose.msra.mxu0 0.0
    %1217 = vmatpush.xpose.msra.mxu0 0.0
    %1218 = vmatpush.xpose.msra.mxu0 0.0
    %1219 = vmatpush.xpose.msra.mxu0 0.0
    %1220 = vmatpush.xpose.msra.mxu0 0.0
    %1221 = vmatpush.xpose.msra.mxu0 0.0
    %1222 = vmatpush.xpose.msra.mxu0 0.0
    %1223 = vmatpush.xpose.msra.mxu0 %v1206
    %1224 = vmatmul.f32.gmra.mxu0 %v1203
    %v1225 = vpop.f32.mrf.mxu0
    %v1226 = vadd.f32 %v113, %v1225
    %1227 = vdwg.mxu0
    %v1229 = vsel %vm240, %v1148, 0
    %v1232 = vsel %vm240, %v1174, 0
    %1234 = vmatpush.xpose.msra.mxu0 0.0
    %1235 = vmatpush.xpose.msra.mxu0 0.0
    %1236 = vmatpush.xpose.msra.mxu0 0.0
    %1237 = vmatpush.xpose.msra.mxu0 0.0
    %1238 = vmatpush.xpose.msra.mxu0 0.0
    %1239 = vmatpush.xpose.msra.mxu0 0.0
    %1240 = vmatpush.xpose.msra.mxu0 0.0
    %1241 = vmatpush.xpose.msra.mxu0 0.0
    %1242 = vmatpush.xpose.msra.mxu0 0.0
    %1243 = vmatpush.xpose.msra.mxu0 0.0
    %1244 = vmatpush.xpose.msra.mxu0 0.0
    %1245 = vmatpush.xpose.msra.mxu0 0.0
    %1246 = vmatpush.xpose.msra.mxu0 0.0
    %1247 = vmatpush.xpose.msra.mxu0 0.0
    %1248 = vmatpush.xpose.msra.mxu0 0.0
    %1249 = vmatpush.xpose.msra.mxu0 %v1232
    %1250 = vmatmul.f32.gmra.mxu0 %v1229
    %v1251 = vpop.f32.mrf.mxu0
    %v1252 = vadd.f32 %v114, %v1251
    %1253 = vdwg.mxu0
    %v1254 = vsel %vm240, %v1226, -inf
    %1255 = vmax.xlane.f32.xlu0 %v1254
    %v1256 = vpop.xlane.xlu0 %1255
    %v1257 = vsel %vm240, %v1252, -inf
    %1258 = vmax.xlane.f32.xlu0 %v1257
    %v1259 = vpop.xlane.xlu0 %1258
    %v1260 = vsub.f32 %v1226, %v1256
    %v1261 = vsub.f32 %v1252, %v1259
    %v1262 = vmul.f32 %v1260, 1.442695
    %v1263 = vpow.pop %v1262
    %v1264 = vmul.f32 %v1261, 1.442695
    %v1265 = vpow.pop %v1264
    %v1266 = vsel %vm240, %v1263, 0.0
    %1267 = vadd.xlane.f32.xlu0 %v1266
    %v1268 = vpop.xlane.xlu0 %1267
    %v1269 = vsel %vm240, %v1265, 0.0
    %1270 = vadd.xlane.f32.xlu0 %v1269
    %v1271 = vpop.xlane.xlu0 %1270
    %v1272 = vrcp.pop %v1268
    %v1273 = vrcp.pop %v1271
    %v1274 = vmul.f32 %v1263, %v1272
    %v1275 = vmul.f32 %v1265, %v1273
    %v1277 = vsel %vm240, %v1274, 0
    %1279 = vmatpush.msra.mxu0 0.0
    %1280 = vmatpush.msra.mxu0 0.0
    %1281 = vmatpush.msra.mxu0 0.0
    %1282 = vmatpush.msra.mxu0 0.0
    %1283 = vmatpush.msra.mxu0 0.0
    %1284 = vmatpush.msra.mxu0 0.0
    %1285 = vmatpush.msra.mxu0 0.0
    %1286 = vmatpush.msra.mxu0 0.0
    %1287 = vmatpush.msra.mxu0 0.0
    %1288 = vmatpush.msra.mxu0 0.0
    %1289 = vmatpush.msra.mxu0 0.0
    %1290 = vmatpush.msra.mxu0 0.0
    %1291 = vmatpush.msra.mxu0 0.0
    %1292 = vmatpush.msra.mxu0 0.0
    %1293 = vmatpush.msra.mxu0 0.0
    %1294 = vmatpush.msra.mxu0 %v1197
    %1295 = vmatmul.f32.gmra.mxu0 %v1277
    %v1296 = vpop.f32.mrf.mxu0
    %v1297 = vadd.f32 0.0, %v1296
    %1298 = vdwg.mxu0
    %v1300 = vsel %vm240, %v1275, 0
    %1302 = vmatpush.msra.mxu0 0.0
    %1303 = vmatpush.msra.mxu0 0.0
    %1304 = vmatpush.msra.mxu0 0.0
    %1305 = vmatpush.msra.mxu0 0.0
    %1306 = vmatpush.msra.mxu0 0.0
    %1307 = vmatpush.msra.mxu0 0.0
    %1308 = vmatpush.msra.mxu0 0.0
    %1309 = vmatpush.msra.mxu0 0.0
    %1310 = vmatpush.msra.mxu0 0.0
    %1311 = vmatpush.msra.mxu0 0.0
    %1312 = vmatpush.msra.mxu0 0.0
    %1313 = vmatpush.msra.mxu0 0.0
    %1314 = vmatpush.msra.mxu0 0.0
    %1315 = vmatpush.msra.mxu0 0.0
    %1316 = vmatpush.msra.mxu0 0.0
    %1317 = vmatpush.msra.mxu0 %v1200
    %1318 = vmatmul.f32.gmra.mxu0 %v1300
    %v1319 = vpop.f32.mrf.mxu0
    %v1320 = vadd.f32 0.0, %v1319
    %1321 = vdwg.mxu0
    %1322 = vrot.lane.b32.xlu0 %v1145, 120
    %v1323 = vpop.permute.xlu0 %1322
    %1324 = vrot.lane.b32.xlu0 %v1171, 120
    %v1325 = vpop.permute.xlu0 %1324
    %v1326 = vsel %vm240, %v1323, 0
    %v1328 = vsel %vm240, %v1325, 0
    %1330 = vmatpush.xpose.msra.mxu0 0.0
    %1331 = vmatpush.xpose.msra.mxu0 0.0
    %1332 = vmatpush.xpose.msra.mxu0 0.0
    %1333 = vmatpush.xpose.msra.mxu0 0.0
    %1334 = vmatpush.xpose.msra.mxu0 0.0
    %1335 = vmatpush.xpose.msra.mxu0 0.0
    %1336 = vmatpush.xpose.msra.mxu0 0.0
    %1337 = vmatpush.xpose.msra.mxu0 0.0
    %1338 = vmatpush.xpose.msra.mxu0 0.0
    %1339 = vmatpush.xpose.msra.mxu0 0.0
    %1340 = vmatpush.xpose.msra.mxu0 0.0
    %1341 = vmatpush.xpose.msra.mxu0 0.0
    %1342 = vmatpush.xpose.msra.mxu0 0.0
    %1343 = vmatpush.xpose.msra.mxu0 0.0
    %1344 = vmatpush.xpose.msra.mxu0 0.0
    %1345 = vmatpush.xpose.msra.mxu0 %v1328
    %1346 = vmatmul.f32.gmra.mxu0 %v1326
    %v1347 = vpop.f32.mrf.mxu0
    %v1348 = vadd.f32 %v113, %v1347
    %1349 = vdwg.mxu0
    %1350 = vrot.lane.b32.xlu0 %v1148, 120
    %v1351 = vpop.permute.xlu0 %1350
    %1352 = vrot.lane.b32.xlu0 %v1174, 120
    %v1353 = vpop.permute.xlu0 %1352
    %v1354 = vsel %vm240, %v1351, 0
    %v1356 = vsel %vm240, %v1353, 0
    %1358 = vmatpush.xpose.msra.mxu0 0.0
    %1359 = vmatpush.xpose.msra.mxu0 0.0
    %1360 = vmatpush.xpose.msra.mxu0 0.0
    %1361 = vmatpush.xpose.msra.mxu0 0.0
    %1362 = vmatpush.xpose.msra.mxu0 0.0
    %1363 = vmatpush.xpose.msra.mxu0 0.0
    %1364 = vmatpush.xpose.msra.mxu0 0.0
    %1365 = vmatpush.xpose.msra.mxu0 0.0
    %1366 = vmatpush.xpose.msra.mxu0 0.0
    %1367 = vmatpush.xpose.msra.mxu0 0.0
    %1368 = vmatpush.xpose.msra.mxu0 0.0
    %1369 = vmatpush.xpose.msra.mxu0 0.0
    %1370 = vmatpush.xpose.msra.mxu0 0.0
    %1371 = vmatpush.xpose.msra.mxu0 0.0
    %1372 = vmatpush.xpose.msra.mxu0 0.0
    %1373 = vmatpush.xpose.msra.mxu0 %v1356
    %1374 = vmatmul.f32.gmra.mxu0 %v1354
    %v1375 = vpop.f32.mrf.mxu0
    %v1376 = vadd.f32 %v114, %v1375
    %1377 = vdwg.mxu0
    %v1378 = vsel %vm240, %v1348, -inf
    %1379 = vmax.xlane.f32.xlu0 %v1378
    %v1380 = vpop.xlane.xlu0 %1379
    %v1381 = vsel %vm240, %v1376, -inf
    %1382 = vmax.xlane.f32.xlu0 %v1381
    %v1383 = vpop.xlane.xlu0 %1382
    %v1384 = vsub.f32 %v1348, %v1380
    %v1385 = vsub.f32 %v1376, %v1383
    %v1386 = vmul.f32 %v1384, 1.442695
    %v1387 = vpow.pop %v1386
    %v1388 = vmul.f32 %v1385, 1.442695
    %v1389 = vpow.pop %v1388
    %v1390 = vsel %vm240, %v1387, 0.0
    %1391 = vadd.xlane.f32.xlu0 %v1390
    %v1392 = vpop.xlane.xlu0 %1391
    %v1393 = vsel %vm240, %v1389, 0.0
    %1394 = vadd.xlane.f32.xlu0 %v1393
    %v1395 = vpop.xlane.xlu0 %1394
    %v1396 = vrcp.pop %v1392
    %v1397 = vrcp.pop %v1395
    %v1398 = vmul.f32 %v1387, %v1396
    %v1399 = vmul.f32 %v1389, %v1397
    %1401 = vrot.lane.b32.xlu0 %v1197, 120
    %v1402 = vpop.permute.xlu0 %1401
    %v1405 = vsel %vm240, %v1398, 0
    %1407 = vmatpush.msra.mxu0 0.0
    %1408 = vmatpush.msra.mxu0 0.0
    %1409 = vmatpush.msra.mxu0 0.0
    %1410 = vmatpush.msra.mxu0 0.0
    %1411 = vmatpush.msra.mxu0 0.0
    %1412 = vmatpush.msra.mxu0 0.0
    %1413 = vmatpush.msra.mxu0 0.0
    %1414 = vmatpush.msra.mxu0 0.0
    %1415 = vmatpush.msra.mxu0 0.0
    %1416 = vmatpush.msra.mxu0 0.0
    %1417 = vmatpush.msra.mxu0 0.0
    %1418 = vmatpush.msra.mxu0 0.0
    %1419 = vmatpush.msra.mxu0 0.0
    %1420 = vmatpush.msra.mxu0 0.0
    %1421 = vmatpush.msra.mxu0 0.0
    %1422 = vmatpush.msra.mxu0 %v1402
    %1423 = vmatmul.f32.gmra.mxu0 %v1405
    %v1424 = vpop.f32.mrf.mxu0
    %v1425 = vadd.f32 0.0, %v1424
    %1426 = vdwg.mxu0
    %1428 = vrot.lane.b32.xlu0 %v1200, 120
    %v1429 = vpop.permute.xlu0 %1428
    %v1432 = vsel %vm240, %v1399, 0
    %1434 = vmatpush.msra.mxu0 0.0
    %1435 = vmatpush.msra.mxu0 0.0
    %1436 = vmatpush.msra.mxu0 0.0
    %1437 = vmatpush.msra.mxu0 0.0
    %1438 = vmatpush.msra.mxu0 0.0
    %1439 = vmatpush.msra.mxu0 0.0
    %1440 = vmatpush.msra.mxu0 0.0
    %1441 = vmatpush.msra.mxu0 0.0
    %1442 = vmatpush.msra.mxu0 0.0
    %1443 = vmatpush.msra.mxu0 0.0
    %1444 = vmatpush.msra.mxu0 0.0
    %1445 = vmatpush.msra.mxu0 0.0
    %1446 = vmatpush.msra.mxu0 0.0
    %1447 = vmatpush.msra.mxu0 0.0
    %1448 = vmatpush.msra.mxu0 0.0
    %1449 = vmatpush.msra.mxu0 %v1429
    %1450 = vmatmul.f32.gmra.mxu0 %v1432
    %v1451 = vpop.f32.mrf.mxu0
    %v1452 = vadd.f32 0.0, %v1451
    %1453 = vdwg.mxu0
    %v1455 = vsel %vm240, %v1425, 0
    %v1458 = vsel %vm240, %v1452, 0
    %1460 = vmatpush.msra.mxu0 0.0
    %1461 = vmatpush.msra.mxu0 0.0
    %1462 = vmatpush.msra.mxu0 0.0
    %1463 = vmatpush.msra.mxu0 0.0
    %1464 = vmatpush.msra.mxu0 0.0
    %1465 = vmatpush.msra.mxu0 0.0
    %1466 = vmatpush.msra.mxu0 0.0
    %1467 = vmatpush.msra.mxu0 0.0
    %1468 = vmatpush.msra.mxu0 0.0
    %1469 = vmatpush.msra.mxu0 0.0
    %1470 = vmatpush.msra.mxu0 0.0
    %1471 = vmatpush.msra.mxu0 0.0
    %1472 = vmatpush.msra.mxu0 0.0
    %1473 = vmatpush.msra.mxu0 0.0
    %1474 = vmatpush.msra.mxu0 0.0
    %1475 = vmatpush.msra.mxu0 %v1087
    %1476 = vmatmul.f32.gmra.mxu0 %v1455
    %v1477 = vpop.f32.mrf.mxu0
    %v1478 = vadd.f32 0.0, %v1477
    %1479 = vmatmul.f32.gmra.mxu0 %v1458
    %v1480 = vpop.f32.mrf.mxu0
    %v1481 = vadd.f32 0.0, %v1480
    %1482 = vdwg.mxu0
    %v1484 = vsel %vm240, %v1297, 0
    %v1487 = vsel %vm240, %v1320, 0
    %1489 = vmatpush.msra.mxu0 0.0
    %1490 = vmatpush.msra.mxu0 0.0
    %1491 = vmatpush.msra.mxu0 0.0
    %1492 = vmatpush.msra.mxu0 0.0
    %1493 = vmatpush.msra.mxu0 0.0
    %1494 = vmatpush.msra.mxu0 0.0
    %1495 = vmatpush.msra.mxu0 0.0
    %1496 = vmatpush.msra.mxu0 0.0
    %1497 = vmatpush.msra.mxu0 0.0
    %1498 = vmatpush.msra.mxu0 0.0
    %1499 = vmatpush.msra.mxu0 0.0
    %1500 = vmatpush.msra.mxu0 0.0
    %1501 = vmatpush.msra.mxu0 0.0
    %1502 = vmatpush.msra.mxu0 0.0
    %1503 = vmatpush.msra.mxu0 0.0
    %1504 = vmatpush.msra.mxu0 %v1086
    %1505 = vmatmul.f32.gmra.mxu0 %v1484
    %v1506 = vpop.f32.mrf.mxu0
    %v1507 = vadd.f32 %v1478, %v1506
    %1508 = vmatmul.f32.gmra.mxu0 %v1487
    %v1509 = vpop.f32.mrf.mxu0
    %v1510 = vadd.f32 %v1481, %v1509
    %1511 = vdwg.mxu0
    %1512 = vrot.lane.b32.xlu0 %v1145, 112
    %v1513 = vpop.permute.xlu0 %1512
    %1514 = vrot.lane.b32.xlu0 %v1171, 112
    %v1515 = vpop.permute.xlu0 %1514
    %v1516 = vsel %vm240, %v1513, 0
    %v1518 = vsel %vm240, %v1515, 0
    %1520 = vmatpush.xpose.msra.mxu0 0.0
    %1521 = vmatpush.xpose.msra.mxu0 0.0
    %1522 = vmatpush.xpose.msra.mxu0 0.0
    %1523 = vmatpush.xpose.msra.mxu0 0.0
    %1524 = vmatpush.xpose.msra.mxu0 0.0
    %1525 = vmatpush.xpose.msra.mxu0 0.0
    %1526 = vmatpush.xpose.msra.mxu0 0.0
    %1527 = vmatpush.xpose.msra.mxu0 0.0
    %1528 = vmatpush.xpose.msra.mxu0 0.0
    %1529 = vmatpush.xpose.msra.mxu0 0.0
    %1530 = vmatpush.xpose.msra.mxu0 0.0
    %1531 = vmatpush.xpose.msra.mxu0 0.0
    %1532 = vmatpush.xpose.msra.mxu0 0.0
    %1533 = vmatpush.xpose.msra.mxu0 0.0
    %1534 = vmatpush.xpose.msra.mxu0 0.0
    %1535 = vmatpush.xpose.msra.mxu0 %v1518
    %1536 = vmatmul.f32.gmra.mxu0 %v1516
    %v1537 = vpop.f32.mrf.mxu0
    %v1538 = vadd.f32 %v113, %v1537
    %1539 = vdwg.mxu0
    %1540 = vrot.lane.b32.xlu0 %v1148, 112
    %v1541 = vpop.permute.xlu0 %1540
    %1542 = vrot.lane.b32.xlu0 %v1174, 112
    %v1543 = vpop.permute.xlu0 %1542
    %v1544 = vsel %vm240, %v1541, 0
    %v1546 = vsel %vm240, %v1543, 0
    %1548 = vmatpush.xpose.msra.mxu0 0.0
    %1549 = vmatpush.xpose.msra.mxu0 0.0
    %1550 = vmatpush.xpose.msra.mxu0 0.0
    %1551 = vmatpush.xpose.msra.mxu0 0.0
    %1552 = vmatpush.xpose.msra.mxu0 0.0
    %1553 = vmatpush.xpose.msra.mxu0 0.0
    %1554 = vmatpush.xpose.msra.mxu0 0.0
    %1555 = vmatpush.xpose.msra.mxu0 0.0
    %1556 = vmatpush.xpose.msra.mxu0 0.0
    %1557 = vmatpush.xpose.msra.mxu0 0.0
    %1558 = vmatpush.xpose.msra.mxu0 0.0
    %1559 = vmatpush.xpose.msra.mxu0 0.0
    %1560 = vmatpush.xpose.msra.mxu0 0.0
    %1561 = vmatpush.xpose.msra.mxu0 0.0
    %1562 = vmatpush.xpose.msra.mxu0 0.0
    %1563 = vmatpush.xpose.msra.mxu0 %v1546
    %1564 = vmatmul.f32.gmra.mxu0 %v1544
    %v1565 = vpop.f32.mrf.mxu0
    %v1566 = vadd.f32 %v114, %v1565
    %1567 = vdwg.mxu0
    %v1568 = vsel %vm240, %v1538, -inf
    %1569 = vmax.xlane.f32.xlu0 %v1568
    %v1570 = vpop.xlane.xlu0 %1569
    %v1571 = vsel %vm240, %v1566, -inf
    %1572 = vmax.xlane.f32.xlu0 %v1571
    %v1573 = vpop.xlane.xlu0 %1572
    %v1574 = vsub.f32 %v1538, %v1570
    %v1575 = vsub.f32 %v1566, %v1573
    %v1576 = vmul.f32 %v1574, 1.442695
    %v1577 = vpow.pop %v1576
    %v1578 = vmul.f32 %v1575, 1.442695
    %v1579 = vpow.pop %v1578
    %v1580 = vsel %vm240, %v1577, 0.0
    %1581 = vadd.xlane.f32.xlu0 %v1580
    %v1582 = vpop.xlane.xlu0 %1581
    %v1583 = vsel %vm240, %v1579, 0.0
    %1584 = vadd.xlane.f32.xlu0 %v1583
    %v1585 = vpop.xlane.xlu0 %1584
    %v1586 = vrcp.pop %v1582
    %v1587 = vrcp.pop %v1585
    %v1588 = vmul.f32 %v1577, %v1586
    %v1589 = vmul.f32 %v1579, %v1587
    %1590 = vrot.lane.b32.xlu0 %v1197, 112
    %v1591 = vpop.permute.xlu0 %1590
    %v1594 = vsel %vm240, %v1588, 0
    %1596 = vmatpush.msra.mxu0 0.0
    %1597 = vmatpush.msra.mxu0 0.0
    %1598 = vmatpush.msra.mxu0 0.0
    %1599 = vmatpush.msra.mxu0 0.0
    %1600 = vmatpush.msra.mxu0 0.0
    %1601 = vmatpush.msra.mxu0 0.0
    %1602 = vmatpush.msra.mxu0 0.0
    %1603 = vmatpush.msra.mxu0 0.0
    %1604 = vmatpush.msra.mxu0 0.0
    %1605 = vmatpush.msra.mxu0 0.0
    %1606 = vmatpush.msra.mxu0 0.0
    %1607 = vmatpush.msra.mxu0 0.0
    %1608 = vmatpush.msra.mxu0 0.0
    %1609 = vmatpush.msra.mxu0 0.0
    %1610 = vmatpush.msra.mxu0 0.0
    %1611 = vmatpush.msra.mxu0 %v1591
    %1612 = vmatmul.f32.gmra.mxu0 %v1594
    %v1613 = vpop.f32.mrf.mxu0
    %v1614 = vadd.f32 0.0, %v1613
    %1615 = vdwg.mxu0
    %1616 = vrot.lane.b32.xlu0 %v1200, 112
    %v1617 = vpop.permute.xlu0 %1616
    %v1620 = vsel %vm240, %v1589, 0
    %1622 = vmatpush.msra.mxu0 0.0
    %1623 = vmatpush.msra.mxu0 0.0
    %1624 = vmatpush.msra.mxu0 0.0
    %1625 = vmatpush.msra.mxu0 0.0
    %1626 = vmatpush.msra.mxu0 0.0
    %1627 = vmatpush.msra.mxu0 0.0
    %1628 = vmatpush.msra.mxu0 0.0
    %1629 = vmatpush.msra.mxu0 0.0
    %1630 = vmatpush.msra.mxu0 0.0
    %1631 = vmatpush.msra.mxu0 0.0
    %1632 = vmatpush.msra.mxu0 0.0
    %1633 = vmatpush.msra.mxu0 0.0
    %1634 = vmatpush.msra.mxu0 0.0
    %1635 = vmatpush.msra.mxu0 0.0
    %1636 = vmatpush.msra.mxu0 0.0
    %1637 = vmatpush.msra.mxu0 %v1617
    %1638 = vmatmul.f32.gmra.mxu0 %v1620
    %v1639 = vpop.f32.mrf.mxu0
    %v1640 = vadd.f32 0.0, %v1639
    %1641 = vdwg.mxu0
    %v1643 = vsel %vm240, %v1614, 0
    %v1646 = vsel %vm240, %v1640, 0
    %1648 = vmatpush.msra.mxu0 0.0
    %1649 = vmatpush.msra.mxu0 0.0
    %1650 = vmatpush.msra.mxu0 0.0
    %1651 = vmatpush.msra.mxu0 0.0
    %1652 = vmatpush.msra.mxu0 0.0
    %1653 = vmatpush.msra.mxu0 0.0
    %1654 = vmatpush.msra.mxu0 0.0
    %1655 = vmatpush.msra.mxu0 0.0
    %1656 = vmatpush.msra.mxu0 0.0
    %1657 = vmatpush.msra.mxu0 0.0
    %1658 = vmatpush.msra.mxu0 0.0
    %1659 = vmatpush.msra.mxu0 0.0
    %1660 = vmatpush.msra.mxu0 0.0
    %1661 = vmatpush.msra.mxu0 0.0
    %1662 = vmatpush.msra.mxu0 0.0
    %1663 = vmatpush.msra.mxu0 %v1088
    %1664 = vmatmul.f32.gmra.mxu0 %v1643
    %v1665 = vpop.f32.mrf.mxu0
    %v1666 = vadd.f32 0.0, %v1665
    %1667 = vmatmul.f32.gmra.mxu0 %v1646
    %v1668 = vpop.f32.mrf.mxu0
    %v1669 = vadd.f32 0.0, %v1668
    %1670 = vdwg.mxu0
    %v1671 = vadd.f32 %v1507, %v1666
    %v1672 = vadd.f32 %v1510, %v1669
    %1673 = vrot.lane.b32.xlu0 %v1145, 104
    %v1674 = vpop.permute.xlu0 %1673
    %1675 = vrot.lane.b32.xlu0 %v1171, 104
    %v1676 = vpop.permute.xlu0 %1675
    %v1677 = vsel %vm240, %v1674, 0
    %v1679 = vsel %vm240, %v1676, 0
    %1681 = vmatpush.xpose.msra.mxu0 0.0
    %1682 = vmatpush.xpose.msra.mxu0 0.0
    %1683 = vmatpush.xpose.msra.mxu0 0.0
    %1684 = vmatpush.xpose.msra.mxu0 0.0
    %1685 = vmatpush.xpose.msra.mxu0 0.0
    %1686 = vmatpush.xpose.msra.mxu0 0.0
    %1687 = vmatpush.xpose.msra.mxu0 0.0
    %1688 = vmatpush.xpose.msra.mxu0 0.0
    %1689 = vmatpush.xpose.msra.mxu0 0.0
    %1690 = vmatpush.xpose.msra.mxu0 0.0
    %1691 = vmatpush.xpose.msra.mxu0 0.0
    %1692 = vmatpush.xpose.msra.mxu0 0.0
    %1693 = vmatpush.xpose.msra.mxu0 0.0
    %1694 = vmatpush.xpose.msra.mxu0 0.0
    %1695 = vmatpush.xpose.msra.mxu0 0.0
    %1696 = vmatpush.xpose.msra.mxu0 %v1679
    %1697 = vmatmul.f32.gmra.mxu0 %v1677
    %v1698 = vpop.f32.mrf.mxu0
    %v1699 = vadd.f32 %v113, %v1698
    %1700 = vdwg.mxu0
    %1701 = vrot.lane.b32.xlu0 %v1148, 104
    %v1702 = vpop.permute.xlu0 %1701
    %1703 = vrot.lane.b32.xlu0 %v1174, 104
    %v1704 = vpop.permute.xlu0 %1703
    %v1705 = vsel %vm240, %v1702, 0
    %v1707 = vsel %vm240, %v1704, 0
    %1709 = vmatpush.xpose.msra.mxu0 0.0
    %1710 = vmatpush.xpose.msra.mxu0 0.0
    %1711 = vmatpush.xpose.msra.mxu0 0.0
    %1712 = vmatpush.xpose.msra.mxu0 0.0
    %1713 = vmatpush.xpose.msra.mxu0 0.0
    %1714 = vmatpush.xpose.msra.mxu0 0.0
    %1715 = vmatpush.xpose.msra.mxu0 0.0
    %1716 = vmatpush.xpose.msra.mxu0 0.0
    %1717 = vmatpush.xpose.msra.mxu0 0.0
    %1718 = vmatpush.xpose.msra.mxu0 0.0
    %1719 = vmatpush.xpose.msra.mxu0 0.0
    %1720 = vmatpush.xpose.msra.mxu0 0.0
    %1721 = vmatpush.xpose.msra.mxu0 0.0
    %1722 = vmatpush.xpose.msra.mxu0 0.0
    %1723 = vmatpush.xpose.msra.mxu0 0.0
    %1724 = vmatpush.xpose.msra.mxu0 %v1707
    %1725 = vmatmul.f32.gmra.mxu0 %v1705
    %v1726 = vpop.f32.mrf.mxu0
    %v1727 = vadd.f32 %v114, %v1726
    %1728 = vdwg.mxu0
    %v1729 = vsel %vm240, %v1699, -inf
    %1730 = vmax.xlane.f32.xlu0 %v1729
    %v1731 = vpop.xlane.xlu0 %1730
    %v1732 = vsel %vm240, %v1727, -inf
    %1733 = vmax.xlane.f32.xlu0 %v1732
    %v1734 = vpop.xlane.xlu0 %1733
    %v1735 = vsub.f32 %v1699, %v1731
    %v1736 = vsub.f32 %v1727, %v1734
    %v1737 = vmul.f32 %v1735, 1.442695
    %v1738 = vpow.pop %v1737
    %v1739 = vmul.f32 %v1736, 1.442695
    %v1740 = vpow.pop %v1739
    %v1741 = vsel %vm240, %v1738, 0.0
    %1742 = vadd.xlane.f32.xlu0 %v1741
    %v1743 = vpop.xlane.xlu0 %1742
    %v1744 = vsel %vm240, %v1740, 0.0
    %1745 = vadd.xlane.f32.xlu0 %v1744
    %v1746 = vpop.xlane.xlu0 %1745
    %v1747 = vrcp.pop %v1743
    %v1748 = vrcp.pop %v1746
    %v1749 = vmul.f32 %v1738, %v1747
    %v1750 = vmul.f32 %v1740, %v1748
    %1751 = vrot.lane.b32.xlu0 %v1197, 104
    %v1752 = vpop.permute.xlu0 %1751
    %v1755 = vsel %vm240, %v1749, 0
    %1757 = vmatpush.msra.mxu0 0.0
    %1758 = vmatpush.msra.mxu0 0.0
    %1759 = vmatpush.msra.mxu0 0.0
    %1760 = vmatpush.msra.mxu0 0.0
    %1761 = vmatpush.msra.mxu0 0.0
    %1762 = vmatpush.msra.mxu0 0.0
    %1763 = vmatpush.msra.mxu0 0.0
    %1764 = vmatpush.msra.mxu0 0.0
    %1765 = vmatpush.msra.mxu0 0.0
    %1766 = vmatpush.msra.mxu0 0.0
    %1767 = vmatpush.msra.mxu0 0.0
    %1768 = vmatpush.msra.mxu0 0.0
    %1769 = vmatpush.msra.mxu0 0.0
    %1770 = vmatpush.msra.mxu0 0.0
    %1771 = vmatpush.msra.mxu0 0.0
    %1772 = vmatpush.msra.mxu0 %v1752
    %1773 = vmatmul.f32.gmra.mxu0 %v1755
    %v1774 = vpop.f32.mrf.mxu0
    %v1775 = vadd.f32 0.0, %v1774
    %1776 = vdwg.mxu0
    %1777 = vrot.lane.b32.xlu0 %v1200, 104
    %v1778 = vpop.permute.xlu0 %1777
    %v1781 = vsel %vm240, %v1750, 0
    %1783 = vmatpush.msra.mxu0 0.0
    %1784 = vmatpush.msra.mxu0 0.0
    %1785 = vmatpush.msra.mxu0 0.0
    %1786 = vmatpush.msra.mxu0 0.0
    %1787 = vmatpush.msra.mxu0 0.0
    %1788 = vmatpush.msra.mxu0 0.0
    %1789 = vmatpush.msra.mxu0 0.0
    %1790 = vmatpush.msra.mxu0 0.0
    %1791 = vmatpush.msra.mxu0 0.0
    %1792 = vmatpush.msra.mxu0 0.0
    %1793 = vmatpush.msra.mxu0 0.0
    %1794 = vmatpush.msra.mxu0 0.0
    %1795 = vmatpush.msra.mxu0 0.0
    %1796 = vmatpush.msra.mxu0 0.0
    %1797 = vmatpush.msra.mxu0 0.0
    %1798 = vmatpush.msra.mxu0 %v1778
    %1799 = vmatmul.f32.gmra.mxu0 %v1781
    %v1800 = vpop.f32.mrf.mxu0
    %v1801 = vadd.f32 0.0, %v1800
    %1802 = vdwg.mxu0
    %v1804 = vsel %vm240, %v1775, 0
    %v1807 = vsel %vm240, %v1801, 0
    %1809 = vmatpush.msra.mxu0 0.0
    %1810 = vmatpush.msra.mxu0 0.0
    %1811 = vmatpush.msra.mxu0 0.0
    %1812 = vmatpush.msra.mxu0 0.0
    %1813 = vmatpush.msra.mxu0 0.0
    %1814 = vmatpush.msra.mxu0 0.0
    %1815 = vmatpush.msra.mxu0 0.0
    %1816 = vmatpush.msra.mxu0 0.0
    %1817 = vmatpush.msra.mxu0 0.0
    %1818 = vmatpush.msra.mxu0 0.0
    %1819 = vmatpush.msra.mxu0 0.0
    %1820 = vmatpush.msra.mxu0 0.0
    %1821 = vmatpush.msra.mxu0 0.0
    %1822 = vmatpush.msra.mxu0 0.0
    %1823 = vmatpush.msra.mxu0 0.0
    %1824 = vmatpush.msra.mxu0 %v1089
    %1825 = vmatmul.f32.gmra.mxu0 %v1804
    %v1826 = vpop.f32.mrf.mxu0
    %v1827 = vadd.f32 0.0, %v1826
    %1828 = vmatmul.f32.gmra.mxu0 %v1807
    %v1829 = vpop.f32.mrf.mxu0
    %v1830 = vadd.f32 0.0, %v1829
    %1831 = vdwg.mxu0
    %v1832 = vadd.f32 %v1671, %v1827
    %v1833 = vadd.f32 %v1672, %v1830
    %v1835 = vperm.slane %v1091, 0
    %v1837 = vadd.f32 %v1832, %v1835
    %v1838 = vadd.f32 %v1833, %v1835
    %v1839 = vadd.f32 %v1062, %v1837
    %v1840 = vadd.f32 %v1063, %v1838
    %v1841 = vsel %vm158, %v1839, 0.0
    %1842 = vadd.xlane.f32.xlu0 %v1841
    %v1843 = vpop.xlane.xlu0 %1842
    %v1844 = vsel %vm158, %v1840, 0.0
    %1845 = vadd.xlane.f32.xlu0 %v1844
    %v1846 = vpop.xlane.xlu0 %1845
    %v1847 = vmul.f32 %v1843, %v892
    %v1848 = vmul.f32 %v1846, %v892
    %v1849 = vsub.f32 %v1839, %v1847
    %v1850 = vsub.f32 %v1840, %v1848
    %v1851 = vmul.f32 %v1849, %v1849
    %v1852 = vmul.f32 %v1850, %v1850
    %v1853 = vsel %vm158, %v1851, 0.0
    %1854 = vadd.xlane.f32.xlu0 %v1853
    %v1855 = vpop.xlane.xlu0 %1854
    %v1856 = vsel %vm158, %v1852, 0.0
    %1857 = vadd.xlane.f32.xlu0 %v1856
    %v1858 = vpop.xlane.xlu0 %1857
    %v1859 = vmul.f32 %v1855, %v892
    %v1860 = vmul.f32 %v1858, %v892
    %v1861 = vadd.f32 %v1859, 1e-05
    %v1862 = vadd.f32 %v1860, 1e-05
    %v1863 = vrsqrt.pop %v1861
    %v1864 = vmul.f32 %v1863, %v1861
    %v1865 = vmul.f32 %v1864, %v1863
    %v1866 = vmul.f32 0.5, %v1865
    %v1867 = vsub.f32 1.5, %v1866
    %v1868 = vmul.f32 %v1863, %v1867
    %vm1869 = vweird.f32 %v1861
    %vm1870 = vweird.f32 %v1863
    %vm1871 = vmor %vm1869, %vm1870
    %v1872 = vsel %vm1871, %v1863, %v1868
    %v1873 = vrsqrt.pop %v1862
    %v1874 = vmul.f32 %v1873, %v1862
    %v1875 = vmul.f32 %v1874, %v1873
    %v1876 = vmul.f32 0.5, %v1875
    %v1877 = vsub.f32 1.5, %v1876
    %v1878 = vmul.f32 %v1873, %v1877
    %vm1879 = vweird.f32 %v1862
    %vm1880 = vweird.f32 %v1873
    %vm1881 = vmor %vm1879, %vm1880
    %v1882 = vsel %vm1881, %v1873, %v1878
    %v1883 = vmul.f32 %v1849, %v1872
    %v1884 = vmul.f32 %v1850, %v1882
    %v1886 = vperm.slane %v1093, 0
    %v1888 = vmul.f32 %v1883, %v1886
    %v1889 = vmul.f32 %v1884, %v1886
    %v1891 = vperm.slane %v1095, 0
    %v1893 = vadd.f32 %v1888, %v1891
    %v1894 = vadd.f32 %v1889, %v1891
    %v1896 = vperm.slane %v1102, 0
    %v1899 = vsel %vm158, %v1893, 0
    %v1902 = vsel %vm158, %v1894, 0
    %1904 = vmatpush.msra.mxu0 0.0
    %1905 = vmatpush.msra.mxu0 0.0
    %1906 = vmatpush.msra.mxu0 0.0
    %1907 = vmatpush.msra.mxu0 0.0
    %1908 = vmatpush.msra.mxu0 0.0
    %1909 = vmatpush.msra.mxu0 0.0
    %1910 = vmatpush.msra.mxu0 0.0
    %1911 = vmatpush.msra.mxu0 0.0
    %1912 = vmatpush.msra.mxu0 0.0
    %1913 = vmatpush.msra.mxu0 0.0
    %1914 = vmatpush.msra.mxu0 0.0
    %1915 = vmatpush.msra.mxu0 0.0
    %1916 = vmatpush.msra.mxu0 %v1100
    %1917 = vmatpush.msra.mxu0 %v1099
    %1918 = vmatpush.msra.mxu0 %v1098
    %1919 = vmatpush.msra.mxu0 %v1097
    %1920 = vmatmul.f32.gmra.mxu0 %v1899
    %v1921 = vpop.f32.mrf.mxu0
    %v1922 = vadd.f32 %v1896, %v1921
    %1923 = vmatmul.f32.gmra.mxu0 %v1902
    %v1924 = vpop.f32.mrf.mxu0
    %v1925 = vadd.f32 %v1896, %v1924
    %1926 = vdwg.mxu0
    %v1927 = vmax.f32 %v1922, 0.0
    %v1928 = vmax.f32 %v1925, 0.0
    %v1930 = vperm.slane %v1113, 0
    %v1933 = vsel %vm978, %v1927, 0
    %v1936 = vsel %vm978, %v1928, 0
    %1938 = vmatpush.msra.mxu0 0.0
    %1939 = vmatpush.msra.mxu0 0.0
    %1940 = vmatpush.msra.mxu0 0.0
    %1941 = vmatpush.msra.mxu0 0.0
    %1942 = vmatpush.msra.mxu0 0.0
    %1943 = vmatpush.msra.mxu0 0.0
    %1944 = vmatpush.msra.mxu0 0.0
    %1945 = vmatpush.msra.mxu0 0.0
    %1946 = vmatpush.msra.mxu0 %v1111
    %1947 = vmatpush.msra.mxu0 %v1110
    %1948 = vmatpush.msra.mxu0 %v1109
    %1949 = vmatpush.msra.mxu0 %v1108
    %1950 = vmatpush.msra.mxu0 %v1107
    %1951 = vmatpush.msra.mxu0 %v1106
    %1952 = vmatpush.msra.mxu0 %v1105
    %1953 = vmatpush.msra.mxu0 %v1104
    %1954 = vmatmul.f32.gmra.mxu0 %v1933
    %v1955 = vpop.f32.mrf.mxu0
    %v1956 = vadd.f32 %v1930, %v1955
    %1957 = vmatmul.f32.gmra.mxu0 %v1936
    %v1958 = vpop.f32.mrf.mxu0
    %v1959 = vadd.f32 %v1930, %v1958
    %1960 = vdwg.mxu0
    %v1961 = vadd.f32 %v1893, %v1956
    %v1962 = vadd.f32 %v1894, %v1959
    %v1963 = vsel %vm158, %v1961, 0.0
    %1964 = vadd.xlane.f32.xlu0 %v1963
    %v1965 = vpop.xlane.xlu0 %1964
    %v1966 = vsel %vm158, %v1962, 0.0
    %1967 = vadd.xlane.f32.xlu0 %v1966
    %v1968 = vpop.xlane.xlu0 %1967
    %v1969 = vmul.f32 %v1965, %v892
    %v1970 = vmul.f32 %v1968, %v892
    %v1971 = vsub.f32 %v1961, %v1969
    %v1972 = vsub.f32 %v1962, %v1970
    %v1973 = vmul.f32 %v1971, %v1971
    %v1974 = vmul.f32 %v1972, %v1972
    %v1975 = vsel %vm158, %v1973, 0.0
    %1976 = vadd.xlane.f32.xlu0 %v1975
    %v1977 = vpop.xlane.xlu0 %1976
    %v1978 = vsel %vm158, %v1974, 0.0
    %1979 = vadd.xlane.f32.xlu0 %v1978
    %v1980 = vpop.xlane.xlu0 %1979
    %v1981 = vmul.f32 %v1977, %v892
    %v1982 = vmul.f32 %v1980, %v892
    %v1983 = vadd.f32 %v1981, 1e-05
    %v1984 = vadd.f32 %v1982, 1e-05
    %v1985 = vrsqrt.pop %v1983
    %v1986 = vmul.f32 %v1985, %v1983
    %v1987 = vmul.f32 %v1986, %v1985
    %v1988 = vmul.f32 0.5, %v1987
    %v1989 = vsub.f32 1.5, %v1988
    %v1990 = vmul.f32 %v1985, %v1989
    %vm1991 = vweird.f32 %v1983
    %vm1992 = vweird.f32 %v1985
    %vm1993 = vmor %vm1991, %vm1992
    %v1994 = vsel %vm1993, %v1985, %v1990
    %v1995 = vrsqrt.pop %v1984
    %v1996 = vmul.f32 %v1995, %v1984
    %v1997 = vmul.f32 %v1996, %v1995
    %v1998 = vmul.f32 0.5, %v1997
    %v1999 = vsub.f32 1.5, %v1998
    %v2000 = vmul.f32 %v1995, %v1999
    %vm2001 = vweird.f32 %v1984
    %vm2002 = vweird.f32 %v1995
    %vm2003 = vmor %vm2001, %vm2002
    %v2004 = vsel %vm2003, %v1995, %v2000
    %v2005 = vmul.f32 %v1971, %v1994
    %v2006 = vmul.f32 %v1972, %v2004
    %v2008 = vperm.slane %v1115, 0
    %v2010 = vmul.f32 %v2005, %v2008
    %v2011 = vmul.f32 %v2006, %v2008
    %v2013 = vperm.slane %v1117, 0
    %v2015 = vadd.f32 %v2010, %v2013
    %v2016 = vadd.f32 %v2011, %v2013
    %2017 = vst.msk [vmem:[#allocation8] sm:$0xff] %vm158, %v2015
    %2018 = vst.msk [vmem:[#allocation8 + $0x8] sm:$0xff] %vm158, %v2016
    // Predicated region
    $region86: #{bert_encoder_v2.1} parent=1 // pred_check
      _
    $region87: #{bert_encoder_v2.1} parent=1 // pred_check_branch
      %2020 = sbr.rel (0) target = $region89
    $region88: #{bert_encoder_v2.1} parent=1 // pred_region
      %2022 = vsyncadd [#allocation4], 0
      %s2023 = sshll.u32 [#allocation8], 4
      %s2024 = int_to_ptr.vmem [resolvable:$true] %s2023
      %s2025 = sshll.u32 %s18, 4
      %s2026 = int_to_ptr.hbm [resolvable:$true] %s2025
      %2031 = dma.vmem_to_hbm [thread:$0]  %s2024, 256, %s2026, [#allocation4], 128, 128, 8
    $region89: #{bert_encoder_v2.1} parent=1 // pred_fallthru
      _
    // Predicated region
    $region90: #{bert_encoder_v2.1} parent=1 // pred_check
      _
    $region91: #{bert_encoder_v2.1} parent=1 // pred_check_branch
      %2033 = sbr.rel (0) target = $region93
    $region92: #{bert_encoder_v2.1} parent=1 // pred_region
      %2035 = dma.done [#allocation4], 256
    $region93: #{bert_encoder_v2.1} parent=1 // pred_fallthru
      _
    %2036 = vsyncpa [#allocation3], 1
    %2037 = vsyncpa [#allocation6], 1
    %2038 = vsyncpa [#allocation4], 1

</llo_original>
